<compile_context>
chip_gen: v5e
topology: v5e:2x2
jax: 0.10.0
libtpu: 0.0.40
codegen_flags: <defaults>
</compile_context>

<pallas_src>
import functools
import math

import numpy as np
import jax
import jax.numpy as jnp
from jax import lax
from jax.experimental import pallas as pl
from jax.experimental.pallas import tpu as pltpu

KSIZE = 7
PAD = (KSIZE - 1) // 2
BN_EPS = 1e-5


def _cbam_kernel(x_ref, w1_ref, b1_ref, w2_ref, b2_ref, wtap_ref, o_ref, *, H, W):
    Bt, C, HW = x_ref.shape
    dt = o_ref.dtype
    inv_hw = 1.0 / float(HW)
    inv_c = 1.0 / float(C)

    # ---------------- ChannelGate: pooling (batched MLP RHS) ----------------
    # pooled[:, 2b] = avg-pool of batch b, pooled[:, 2b+1] = max-pool of batch b.
    pool_lane = lax.broadcasted_iota(jnp.int32, (C, 2 * Bt), 1)
    pooled = jnp.zeros((C, 2 * Bt), jnp.float32)
    for b in range(Bt):
        xb = x_ref[b].astype(jnp.float32)                       # (C, HW) f32 accumulation
        avg_b = jnp.sum(xb, axis=1, keepdims=True) * inv_hw     # (C, 1)
        max_b = jnp.max(xb, axis=1, keepdims=True)              # (C, 1)
        pooled = jnp.where(pool_lane == 2 * b, avg_b, pooled)
        pooled = jnp.where(pool_lane == 2 * b + 1, max_b, pooled)

    # Shared MLP on all 2*Bt pooled columns at once: two matmuls per block total.
    h = jnp.dot(w1_ref[...], pooled, preferred_element_type=jnp.float32) + b1_ref[...]
    h = jnp.maximum(h, 0.0)                                     # (hid, 2Bt)
    o2 = jnp.dot(w2_ref[...], h, preferred_element_type=jnp.float32) + b2_ref[...]  # (C, 2Bt)

    # ------- apply channel gate + ChannelPool (build comp: (2Bt, HW)) -------
    # comp rows: [max_0, mean_0, max_1, mean_1, ...]  (c = 0: max, c = 1: mean)
    sub = lax.broadcasted_iota(jnp.int32, (2 * Bt, HW), 0)
    comp = jnp.zeros((2 * Bt, HW), jnp.float32)
    for b in range(Bt):
        att_b = jnp.sum(o2[:, 2 * b:2 * b + 2], axis=1, keepdims=True)  # avg + max branch
        ch_scale = jax.nn.sigmoid(att_b)                        # (C, 1) f32
        xcg_b = x_ref[b] * ch_scale.astype(dt)                  # (C, HW), native dtype
        o_ref[b] = xcg_b.astype(dt)                             # stash for the final multiply
        xcg_f = xcg_b.astype(jnp.float32)
        cmax = jnp.max(xcg_f, axis=0, keepdims=True)            # (1, HW)
        cmean = jnp.sum(xcg_f, axis=0, keepdims=True) * inv_c   # (1, HW)
        comp = jnp.where(sub == 2 * b, cmax, comp)
        comp = jnp.where(sub == 2 * b + 1, cmean, comp)

    # ---------------- SpatialGate: 7x7 conv via static lane rolls ----------------
    # Zero-pad mask is built in-kernel from the lane index (no HBM mask operand).
    lane = lax.broadcasted_iota(jnp.int32, (1, HW), 1)
    if W & (W - 1) == 0:
        r_idx = lane >> (W.bit_length() - 1)                    # row  = lane >> log2(W)
        c_idx = lane & (W - 1)                                  # col  = lane & (W-1)
    else:
        r_idx = lane // W
        c_idx = lane - (lane // W) * W
    # Column-bound predicates (depend on dj only); row-bound built per di below.
    cmaskf = [((c_idx >= PAD - dj) & (c_idx < W + PAD - dj)).astype(jnp.float32)
              for dj in range(KSIZE)]

    wtap = wtap_ref[...].astype(jnp.float32)                    # (2Bt, 49), register-resident

    acc = jnp.zeros((2 * Bt, HW), jnp.float32)
    for di in range(KSIZE):
        rmaskf = ((r_idx >= PAD - di) & (r_idx < H + PAD - di)).astype(jnp.float32)
        acc_di = jnp.zeros((2 * Bt, HW), jnp.float32)
        for dj in range(KSIZE):
            t = di * KSIZE + dj
            off = (di - PAD) * W + (dj - PAD)
            shift = (-off) % HW
            sh = comp if shift == 0 else pltpu.roll(comp, shift, 1)  # sh[p] = comp[p + off]
            wcol = wtap[:, t:t + 1]                             # (2Bt, 1) per-row tap weight
            acc_di = acc_di + (sh * wcol) * cmaskf[dj]          # column zero-pad mask
        acc = acc + acc_di * rmaskf                             # row zero-pad mask, hoisted

    # BatchNorm2d(1) in inference mode with default stats
    # (running_mean=0, running_var=1, gamma=1, beta=0).
    # TODO(synk): trained BN params / training-mode per-batch statistics are not reproduced.
    inv_bn = 1.0 / math.sqrt(1.0 + BN_EPS)
    for b in range(Bt):
        conv_b = acc[2 * b:2 * b + 1, :] + acc[2 * b + 1:2 * b + 2, :]  # sum 2 compressed ch.
        sp_scale = jax.nn.sigmoid(conv_b * inv_bn)              # (1, HW) f32
        o_ref[b] = (o_ref[b] * sp_scale.astype(dt)).astype(dt)


def cbam_pallas(x, w1, b1, w2, b2, wconv, *, batch_tile=None):
    B, C, H, W = x.shape
    HW = H * W
    hidden = w1.shape[0]

    # Default: whole batch in one grid step (per-step pipeline overhead dominates at
    # small B).  On v7x (2 TensorCores) with B >= 2, pass batch_tile=B//2 so both
    # cores get a "parallel" grid step.
    if batch_tile is None:
        batch_tile = B
    assert B % batch_tile == 0
    nb = B // batch_tile

    x_flat = x.reshape(B, C, HW)                 # lane-dense spatial axis (unmasked stores)
    # Tiny per-tap weight table: comp row 2*b + c is multiplied by wconv[c, di, dj].
    wtap = jnp.tile(wconv.reshape(2, KSIZE * KSIZE).astype(jnp.float32),
                    (batch_tile, 1))             # (2*Bt, 49)  ~ 0.8 KB

    kernel = functools.partial(_cbam_kernel, H=H, W=W)

    out_flat = pl.pallas_call(
        kernel,
        out_shape=jax.ShapeDtypeStruct((B, C, HW), x.dtype),
        grid_spec=pltpu.PrefetchScalarGridSpec(
            num_scalar_prefetch=0,
            grid=(nb,),
            in_specs=[
                pl.BlockSpec((batch_tile, C, HW), lambda g: (g, 0, 0)),   # x batch-tile slab
                pl.BlockSpec((hidden, C), lambda g: (0, 0)),              # W1 (torch layout)
                pl.BlockSpec((hidden, 1), lambda g: (0, 0)),              # b1
                pl.BlockSpec((C, hidden), lambda g: (0, 0)),              # W2
                pl.BlockSpec((C, 1), lambda g: (0, 0)),                   # b2
                pl.BlockSpec((2 * batch_tile, KSIZE * KSIZE), lambda g: (0, 0)),  # conv taps
            ],
            out_specs=pl.BlockSpec((batch_tile, C, HW), lambda g: (g, 0, 0)),
        ),
        compiler_params=pltpu.CompilerParams(
            dimension_semantics=("parallel",)),   # batch-tile slabs are independent
    )(x_flat, w1, b1, w2, b2, wtap)
    return out_flat.reshape(B, C, H, W)


def cbam_ref(x, w1, b1, w2, b2, wconv):
    """Pure-JAX reference matching the PyTorch forward (BN in eval mode)."""
    avg = x.mean(axis=(2, 3))                               # (B, C)
    mx = x.max(axis=(2, 3))                                 # (B, C)

    def mlp(p):
        h = jnp.maximum(p @ w1.T + b1[:, 0], 0.0)
        return h @ w2.T + b2[:, 0]

    ch = jax.nn.sigmoid(mlp(avg) + mlp(mx))[:, :, None, None]
    xg = x * ch
    comp = jnp.concatenate([xg.max(axis=1, keepdims=True),
                            xg.mean(axis=1, keepdims=True)], axis=1)
    conv = jax.lax.conv_general_dilated(
        comp, wconv[None], window_strides=(1, 1), padding="SAME",
        dimension_numbers=("NCHW", "OIHW", "NCHW"))
    bn = conv / jnp.sqrt(1.0 + BN_EPS)
    return xg * jax.nn.sigmoid(bn)


if __name__ == "__main__":
    B, C, H, W = 2, 32, 16, 16          # gate_channels=32, reduction_ratio=16
    reduction = 16
    hidden = C // reduction

    key = jax.random.PRNGKey(0)
    kx, k1, k2, k3, k4, k5 = jax.random.split(key, 6)
    x = jax.random.normal(kx, (B, C, H, W), jnp.float32)
    w1 = jax.random.normal(k1, (hidden, C), jnp.float32) * 0.2    # Linear(C, C//r).weight
    b1 = jax.random.normal(k2, (hidden, 1), jnp.float32) * 0.1
    w2 = jax.random.normal(k3, (C, hidden), jnp.float32) * 0.2    # Linear(C//r, C).weight
    b2 = jax.random.normal(k4, (C, 1), jnp.float32) * 0.1
    wconv = jax.random.normal(k5, (2, KSIZE, KSIZE), jnp.float32) * 0.1  # Conv2d(2,1,7).weight[0]

    out = cbam_pallas(x, w1, b1, w2, b2, wconv)
    out = jax.block_until_ready(out)

    ref = cbam_ref(x, w1, b1, w2, b2, wconv)
    assert out.shape == x.shape
    np.testing.assert_allclose(np.asarray(out), np.asarray(ref), rtol=1e-2, atol=1e-2)
    print("KERNEL_OK")
</pallas_src>

<mosaic_0001>
module attributes {stable_mosaic.version = 11 : i64} {
  func.func @_cbam_kernel(%arg0: i32, %arg1: memref<2x32x256xf32, #tpu.memory_space<vmem>>, %arg2: memref<2x32xf32, #tpu.memory_space<vmem>>, %arg3: memref<2x1xf32, #tpu.memory_space<vmem>>, %arg4: memref<32x2xf32, #tpu.memory_space<vmem>>, %arg5: memref<32x1xf32, #tpu.memory_space<vmem>>, %arg6: memref<4x49xf32, #tpu.memory_space<vmem>>, %arg7: memref<2x32x256xf32, #tpu.memory_space<vmem>>) attributes {dimension_semantics = [#tpu.dimension_semantics<parallel>], iteration_bounds = array<i64: 1>, scalar_prefetch = 0 : i64, scratch_operands = 0 : i64, tpu.core_type = #tpu.core_type<tc>, window_params = [{transform_indices = @transform_0, window_bounds = array<i64: 2, 32, 256>}, {pipeline_mode = #tpu.pipeline_mode<synchronous>, transform_indices = @transform_1, window_bounds = array<i64: 2, 32>}, {pipeline_mode = #tpu.pipeline_mode<synchronous>, transform_indices = @transform_2, window_bounds = array<i64: 2, 1>}, {pipeline_mode = #tpu.pipeline_mode<synchronous>, transform_indices = @transform_3, window_bounds = array<i64: 32, 2>}, {pipeline_mode = #tpu.pipeline_mode<synchronous>, transform_indices = @transform_4, window_bounds = array<i64: 32, 1>}, {pipeline_mode = #tpu.pipeline_mode<synchronous>, transform_indices = @transform_5, window_bounds = array<i64: 4, 49>}, {transform_indices = @transform_6, window_bounds = array<i64: 2, 32, 256>}]} {
    %0 = tpu.iota {dimensions = array<i32: 1>} : vector<32x4xi32>
    %cst = arith.constant 0.000000e+00 : f32
    %1 = vector.broadcast %cst : f32 to vector<32x4xf32>
    %c0 = arith.constant 0 : index
    %c0_0 = arith.constant 0 : index
    %c0_1 = arith.constant 0 : index
    %2 = vector.load %arg1[%c0, %c0_0, %c0_1] : memref<2x32x256xf32, #tpu.memory_space<vmem>>, vector<1x32x256xf32>
    %3 = vector.shape_cast %2 : vector<1x32x256xf32> to vector<32x256xf32>
    %cst_2 = arith.constant dense<0.000000e+00> : vector<32xf32>
    %4 = vector.multi_reduction <add>, %3, %cst_2 [1] : vector<32x256xf32> to vector<32xf32>
    %5 = vector.shape_cast %4 : vector<32xf32> to vector<32x1xf32>
    %cst_3 = arith.constant 3.906250e-03 : f32
    %6 = vector.broadcast %cst_3 : f32 to vector<32x1xf32>
    %7 = arith.mulf %5, %6 : vector<32x1xf32>
    %cst_4 = arith.constant dense<0xFF800000> : vector<32xf32>
    %8 = vector.multi_reduction <maximumf>, %3, %cst_4 [1] : vector<32x256xf32> to vector<32xf32>
    %9 = vector.shape_cast %8 : vector<32xf32> to vector<32x1xf32>
    %c0_i32 = arith.constant 0 : i32
    %10 = vector.broadcast %c0_i32 : i32 to vector<32x4xi32>
    %11 = arith.cmpi eq, %0, %10 : vector<32x4xi32>
    %12 = vector.shape_cast %7 : vector<32x1xf32> to vector<32x1xf32>
    %13 = vector.broadcast %12 : vector<32x1xf32> to vector<32x4xf32>
    %14 = arith.select %11, %13, %1 : vector<32x4xi1>, vector<32x4xf32>
    %c1_i32 = arith.constant 1 : i32
    %15 = vector.broadcast %c1_i32 : i32 to vector<32x4xi32>
    %16 = arith.cmpi eq, %0, %15 : vector<32x4xi32>
    %17 = vector.shape_cast %9 : vector<32x1xf32> to vector<32x1xf32>
    %18 = vector.broadcast %17 : vector<32x1xf32> to vector<32x4xf32>
    %19 = arith.select %16, %18, %14 : vector<32x4xi1>, vector<32x4xf32>
    %c1 = arith.constant 1 : index
    %c0_5 = arith.constant 0 : index
    %c0_6 = arith.constant 0 : index
    %20 = vector.load %arg1[%c1, %c0_5, %c0_6] : memref<2x32x256xf32, #tpu.memory_space<vmem>>, vector<1x32x256xf32>
    %21 = vector.shape_cast %20 : vector<1x32x256xf32> to vector<32x256xf32>
    %cst_7 = arith.constant dense<0.000000e+00> : vector<32xf32>
    %22 = vector.multi_reduction <add>, %21, %cst_7 [1] : vector<32x256xf32> to vector<32xf32>
    %23 = vector.shape_cast %22 : vector<32xf32> to vector<32x1xf32>
    %cst_8 = arith.constant 3.906250e-03 : f32
    %24 = vector.broadcast %cst_8 : f32 to vector<32x1xf32>
    %25 = arith.mulf %23, %24 : vector<32x1xf32>
    %cst_9 = arith.constant dense<0xFF800000> : vector<32xf32>
    %26 = vector.multi_reduction <maximumf>, %21, %cst_9 [1] : vector<32x256xf32> to vector<32xf32>
    %27 = vector.shape_cast %26 : vector<32xf32> to vector<32x1xf32>
    %c2_i32 = arith.constant 2 : i32
    %28 = vector.broadcast %c2_i32 : i32 to vector<32x4xi32>
    %29 = arith.cmpi eq, %0, %28 : vector<32x4xi32>
    %30 = vector.shape_cast %25 : vector<32x1xf32> to vector<32x1xf32>
    %31 = vector.broadcast %30 : vector<32x1xf32> to vector<32x4xf32>
    %32 = arith.select %29, %31, %19 : vector<32x4xi1>, vector<32x4xf32>
    %c3_i32 = arith.constant 3 : i32
    %33 = vector.broadcast %c3_i32 : i32 to vector<32x4xi32>
    %34 = arith.cmpi eq, %0, %33 : vector<32x4xi32>
    %35 = vector.shape_cast %27 : vector<32x1xf32> to vector<32x1xf32>
    %36 = vector.broadcast %35 : vector<32x1xf32> to vector<32x4xf32>
    %37 = arith.select %34, %36, %32 : vector<32x4xi1>, vector<32x4xf32>
    %c0_10 = arith.constant 0 : index
    %c0_11 = arith.constant 0 : index
    %38 = vector.load %arg2[%c0_10, %c0_11] : memref<2x32xf32, #tpu.memory_space<vmem>>, vector<2x32xf32>
    %cst_12 = arith.constant dense<0.000000e+00> : vector<2x4xf32>
    %39 = tpu.matmul %38, %37, %cst_12 {dimension_numbers = #tpu.dot_dimension_numbers<[1], [0], [0], [1], [0, 0, 1, 1], [], []>} : vector<2x32xf32>, vector<32x4xf32>, vector<2x4xf32> -> vector<2x4xf32>
    %c0_13 = arith.constant 0 : index
    %c0_14 = arith.constant 0 : index
    %40 = vector.load %arg3[%c0_13, %c0_14] : memref<2x1xf32, #tpu.memory_space<vmem>>, vector<2x1xf32>
    %41 = vector.broadcast %40 : vector<2x1xf32> to vector<2x4xf32>
    %42 = arith.addf %39, %41 : vector<2x4xf32>
    %cst_15 = arith.constant 0.000000e+00 : f32
    %43 = vector.broadcast %cst_15 : f32 to vector<2x4xf32>
    %44 = arith.maximumf %42, %43 : vector<2x4xf32>
    %c0_16 = arith.constant 0 : index
    %c0_17 = arith.constant 0 : index
    %45 = vector.load %arg4[%c0_16, %c0_17] : memref<32x2xf32, #tpu.memory_space<vmem>>, vector<32x2xf32>
    %cst_18 = arith.constant dense<0.000000e+00> : vector<32x4xf32>
    %46 = tpu.matmul %45, %44, %cst_18 {dimension_numbers = #tpu.dot_dimension_numbers<[1], [0], [0], [1], [0, 0, 1, 1], [], []>} : vector<32x2xf32>, vector<2x4xf32>, vector<32x4xf32> -> vector<32x4xf32>
    %c0_19 = arith.constant 0 : index
    %c0_20 = arith.constant 0 : index
    %47 = vector.load %arg5[%c0_19, %c0_20] : memref<32x1xf32, #tpu.memory_space<vmem>>, vector<32x1xf32>
    %48 = vector.broadcast %47 : vector<32x1xf32> to vector<32x4xf32>
    %49 = arith.addf %46, %48 : vector<32x4xf32>
    %50 = tpu.iota {dimensions = array<i32: 0>} : vector<4x256xi32>
    %cst_21 = arith.constant 0.000000e+00 : f32
    %51 = vector.broadcast %cst_21 : f32 to vector<4x256xf32>
    %52 = vector.extract_strided_slice %49 {offsets = [0, 0], sizes = [32, 2], strides = [1, 1]} : vector<32x4xf32> to vector<32x2xf32>
    %cst_22 = arith.constant dense<0.000000e+00> : vector<32xf32>
    %53 = vector.multi_reduction <add>, %52, %cst_22 [1] : vector<32x2xf32> to vector<32xf32>
    %54 = vector.shape_cast %53 : vector<32xf32> to vector<32x1xf32>
    %55 = arith.negf %54 : vector<32x1xf32>
    %56 = math.exp %55 : vector<32x1xf32>
    %cst_23 = arith.constant 1.000000e+00 : f32
    %57 = vector.broadcast %cst_23 : f32 to vector<32x1xf32>
    %58 = arith.addf %57, %56 : vector<32x1xf32>
    %59 = arith.divf %57, %58 : vector<32x1xf32>
    %c0_24 = arith.constant 0 : index
    %c0_25 = arith.constant 0 : index
    %c0_26 = arith.constant 0 : index
    %60 = vector.load %arg1[%c0_24, %c0_25, %c0_26] : memref<2x32x256xf32, #tpu.memory_space<vmem>>, vector<1x32x256xf32>
    %61 = vector.shape_cast %60 : vector<1x32x256xf32> to vector<32x256xf32>
    %62 = vector.broadcast %59 : vector<32x1xf32> to vector<32x256xf32>
    %63 = arith.mulf %61, %62 : vector<32x256xf32>
    %c0_27 = arith.constant 0 : index
    %c0_28 = arith.constant 0 : index
    %c0_29 = arith.constant 0 : index
    %64 = vector.load %arg7[%c0_27, %c0_28, %c0_29] : memref<2x32x256xf32, #tpu.memory_space<vmem>>, vector<1x32x256xf32>
    %65 = vector.shape_cast %64 : vector<1x32x256xf32> to vector<32x256xf32>
    %66 = vector.shape_cast %63 : vector<32x256xf32> to vector<1x32x256xf32>
    tpu.vector_store %arg7[%c0_27, %c0_28, %c0_29], %66 {strides = array<i32>} : memref<2x32x256xf32, #tpu.memory_space<vmem>>, vector<1x32x256xf32>,
    %cst_30 = arith.constant dense<0xFF800000> : vector<256xf32>
    %67 = vector.multi_reduction <maximumf>, %63, %cst_30 [0] : vector<32x256xf32> to vector<256xf32>
    %68 = vector.shape_cast %67 : vector<256xf32> to vector<1x256xf32>
    %cst_31 = arith.constant dense<0.000000e+00> : vector<256xf32>
    %69 = vector.multi_reduction <add>, %63, %cst_31 [0] : vector<32x256xf32> to vector<256xf32>
    %70 = vector.shape_cast %69 : vector<256xf32> to vector<1x256xf32>
    %cst_32 = arith.constant 3.125000e-02 : f32
    %71 = vector.broadcast %cst_32 : f32 to vector<1x256xf32>
    %72 = arith.mulf %70, %71 : vector<1x256xf32>
    %c0_i32_33 = arith.constant 0 : i32
    %73 = vector.broadcast %c0_i32_33 : i32 to vector<4x256xi32>
    %74 = arith.cmpi eq, %50, %73 : vector<4x256xi32>
    %75 = vector.shape_cast %68 : vector<1x256xf32> to vector<1x256xf32>
    %76 = vector.broadcast %75 : vector<1x256xf32> to vector<4x256xf32>
    %77 = arith.select %74, %76, %51 : vector<4x256xi1>, vector<4x256xf32>
    %c1_i32_34 = arith.constant 1 : i32
    %78 = vector.broadcast %c1_i32_34 : i32 to vector<4x256xi32>
    %79 = arith.cmpi eq, %50, %78 : vector<4x256xi32>
    %80 = vector.shape_cast %72 : vector<1x256xf32> to vector<1x256xf32>
    %81 = vector.broadcast %80 : vector<1x256xf32> to vector<4x256xf32>
    %82 = arith.select %79, %81, %77 : vector<4x256xi1>, vector<4x256xf32>
    %83 = vector.extract_strided_slice %49 {offsets = [0, 2], sizes = [32, 2], strides = [1, 1]} : vector<32x4xf32> to vector<32x2xf32>
    %cst_35 = arith.constant dense<0.000000e+00> : vector<32xf32>
    %84 = vector.multi_reduction <add>, %83, %cst_35 [1] : vector<32x2xf32> to vector<32xf32>
    %85 = vector.shape_cast %84 : vector<32xf32> to vector<32x1xf32>
    %86 = arith.negf %85 : vector<32x1xf32>
    %87 = math.exp %86 : vector<32x1xf32>
    %cst_36 = arith.constant 1.000000e+00 : f32
    %88 = vector.broadcast %cst_36 : f32 to vector<32x1xf32>
    %89 = arith.addf %88, %87 : vector<32x1xf32>
    %90 = arith.divf %88, %89 : vector<32x1xf32>
    %c1_37 = arith.constant 1 : index
    %c0_38 = arith.constant 0 : index
    %c0_39 = arith.constant 0 : index
    %91 = vector.load %arg1[%c1_37, %c0_38, %c0_39] : memref<2x32x256xf32, #tpu.memory_space<vmem>>, vector<1x32x256xf32>
    %92 = vector.shape_cast %91 : vector<1x32x256xf32> to vector<32x256xf32>
    %93 = vector.broadcast %90 : vector<32x1xf32> to vector<32x256xf32>
    %94 = arith.mulf %92, %93 : vector<32x256xf32>
    %c1_40 = arith.constant 1 : index
    %c0_41 = arith.constant 0 : index
    %c0_42 = arith.constant 0 : index
    %95 = vector.load %arg7[%c1_40, %c0_41, %c0_42] : memref<2x32x256xf32, #tpu.memory_space<vmem>>, vector<1x32x256xf32>
    %96 = vector.shape_cast %95 : vector<1x32x256xf32> to vector<32x256xf32>
    %97 = vector.shape_cast %94 : vector<32x256xf32> to vector<1x32x256xf32>
    tpu.vector_store %arg7[%c1_40, %c0_41, %c0_42], %97 {strides = array<i32>} : memref<2x32x256xf32, #tpu.memory_space<vmem>>, vector<1x32x256xf32>,
    %cst_43 = arith.constant dense<0xFF800000> : vector<256xf32>
    %98 = vector.multi_reduction <maximumf>, %94, %cst_43 [0] : vector<32x256xf32> to vector<256xf32>
    %99 = vector.shape_cast %98 : vector<256xf32> to vector<1x256xf32>
    %cst_44 = arith.constant dense<0.000000e+00> : vector<256xf32>
    %100 = vector.multi_reduction <add>, %94, %cst_44 [0] : vector<32x256xf32> to vector<256xf32>
    %101 = vector.shape_cast %100 : vector<256xf32> to vector<1x256xf32>
    %cst_45 = arith.constant 3.125000e-02 : f32
    %102 = vector.broadcast %cst_45 : f32 to vector<1x256xf32>
    %103 = arith.mulf %101, %102 : vector<1x256xf32>
    %c2_i32_46 = arith.constant 2 : i32
    %104 = vector.broadcast %c2_i32_46 : i32 to vector<4x256xi32>
    %105 = arith.cmpi eq, %50, %104 : vector<4x256xi32>
    %106 = vector.shape_cast %99 : vector<1x256xf32> to vector<1x256xf32>
    %107 = vector.broadcast %106 : vector<1x256xf32> to vector<4x256xf32>
    %108 = arith.select %105, %107, %82 : vector<4x256xi1>, vector<4x256xf32>
    %c3_i32_47 = arith.constant 3 : i32
    %109 = vector.broadcast %c3_i32_47 : i32 to vector<4x256xi32>
    %110 = arith.cmpi eq, %50, %109 : vector<4x256xi32>
    %111 = vector.shape_cast %103 : vector<1x256xf32> to vector<1x256xf32>
    %112 = vector.broadcast %111 : vector<1x256xf32> to vector<4x256xf32>
    %113 = arith.select %110, %112, %108 : vector<4x256xi1>, vector<4x256xf32>
    %114 = tpu.iota {dimensions = array<i32: 1>} : vector<1x256xi32>
    %c4_i32 = arith.constant 4 : i32
    %115 = vector.broadcast %c4_i32 : i32 to vector<1x256xi32>
    %116 = arith.shrsi %114, %115 : vector<1x256xi32>
    %c15_i32 = arith.constant 15 : i32
    %117 = vector.broadcast %c15_i32 : i32 to vector<1x256xi32>
    %118 = arith.andi %114, %117 : vector<1x256xi32>
    %c3_i32_48 = arith.constant 3 : i32
    %119 = vector.broadcast %c3_i32_48 : i32 to vector<1x256xi32>
    %120 = arith.cmpi sge, %118, %119 : vector<1x256xi32>
    %c19_i32 = arith.constant 19 : i32
    %121 = vector.broadcast %c19_i32 : i32 to vector<1x256xi32>
    %122 = arith.cmpi slt, %118, %121 : vector<1x256xi32>
    %123 = arith.andi %120, %122 : vector<1x256xi1>
    %124 = arith.extui %123 : vector<1x256xi1> to vector<1x256xi32>
    %125 = arith.sitofp %124 : vector<1x256xi32> to vector<1x256xf32>
    %c2_i32_49 = arith.constant 2 : i32
    %126 = vector.broadcast %c2_i32_49 : i32 to vector<1x256xi32>
    %127 = arith.cmpi sge, %118, %126 : vector<1x256xi32>
    %c18_i32 = arith.constant 18 : i32
    %128 = vector.broadcast %c18_i32 : i32 to vector<1x256xi32>
    %129 = arith.cmpi slt, %118, %128 : vector<1x256xi32>
    %130 = arith.andi %127, %129 : vector<1x256xi1>
    %131 = arith.extui %130 : vector<1x256xi1> to vector<1x256xi32>
    %132 = arith.sitofp %131 : vector<1x256xi32> to vector<1x256xf32>
    %c1_i32_50 = arith.constant 1 : i32
    %133 = vector.broadcast %c1_i32_50 : i32 to vector<1x256xi32>
    %134 = arith.cmpi sge, %118, %133 : vector<1x256xi32>
    %c17_i32 = arith.constant 17 : i32
    %135 = vector.broadcast %c17_i32 : i32 to vector<1x256xi32>
    %136 = arith.cmpi slt, %118, %135 : vector<1x256xi32>
    %137 = arith.andi %134, %136 : vector<1x256xi1>
    %138 = arith.extui %137 : vector<1x256xi1> to vector<1x256xi32>
    %139 = arith.sitofp %138 : vector<1x256xi32> to vector<1x256xf32>
    %c0_i32_51 = arith.constant 0 : i32
    %140 = vector.broadcast %c0_i32_51 : i32 to vector<1x256xi32>
    %141 = arith.cmpi sge, %118, %140 : vector<1x256xi32>
    %c16_i32 = arith.constant 16 : i32
    %142 = vector.broadcast %c16_i32 : i32 to vector<1x256xi32>
    %143 = arith.cmpi slt, %118, %142 : vector<1x256xi32>
    %144 = arith.andi %141, %143 : vector<1x256xi1>
    %145 = arith.extui %144 : vector<1x256xi1> to vector<1x256xi32>
    %146 = arith.sitofp %145 : vector<1x256xi32> to vector<1x256xf32>
    %c-1_i32 = arith.constant -1 : i32
    %147 = vector.broadcast %c-1_i32 : i32 to vector<1x256xi32>
    %148 = arith.cmpi sge, %118, %147 : vector<1x256xi32>
    %c15_i32_52 = arith.constant 15 : i32
    %149 = vector.broadcast %c15_i32_52 : i32 to vector<1x256xi32>
    %150 = arith.cmpi slt, %118, %149 : vector<1x256xi32>
    %151 = arith.andi %148, %150 : vector<1x256xi1>
    %152 = arith.extui %151 : vector<1x256xi1> to vector<1x256xi32>
    %153 = arith.sitofp %152 : vector<1x256xi32> to vector<1x256xf32>
    %c-2_i32 = arith.constant -2 : i32
    %154 = vector.broadcast %c-2_i32 : i32 to vector<1x256xi32>
    %155 = arith.cmpi sge, %118, %154 : vector<1x256xi32>
    %c14_i32 = arith.constant 14 : i32
    %156 = vector.broadcast %c14_i32 : i32 to vector<1x256xi32>
    %157 = arith.cmpi slt, %118, %156 : vector<1x256xi32>
    %158 = arith.andi %155, %157 : vector<1x256xi1>
    %159 = arith.extui %158 : vector<1x256xi1> to vector<1x256xi32>
    %160 = arith.sitofp %159 : vector<1x256xi32> to vector<1x256xf32>
    %c-3_i32 = arith.constant -3 : i32
    %161 = vector.broadcast %c-3_i32 : i32 to vector<1x256xi32>
    %162 = arith.cmpi sge, %118, %161 : vector<1x256xi32>
    %c13_i32 = arith.constant 13 : i32
    %163 = vector.broadcast %c13_i32 : i32 to vector<1x256xi32>
    %164 = arith.cmpi slt, %118, %163 : vector<1x256xi32>
    %165 = arith.andi %162, %164 : vector<1x256xi1>
    %166 = arith.extui %165 : vector<1x256xi1> to vector<1x256xi32>
    %167 = arith.sitofp %166 : vector<1x256xi32> to vector<1x256xf32>
    %c0_53 = arith.constant 0 : index
    %c0_54 = arith.constant 0 : index
    %168 = vector.load %arg6[%c0_53, %c0_54] : memref<4x49xf32, #tpu.memory_space<vmem>>, vector<4x49xf32>
    %cst_55 = arith.constant 0.000000e+00 : f32
    %169 = vector.broadcast %cst_55 : f32 to vector<4x256xf32>
    %c3_i32_56 = arith.constant 3 : i32
    %170 = vector.broadcast %c3_i32_56 : i32 to vector<1x256xi32>
    %171 = arith.cmpi sge, %116, %170 : vector<1x256xi32>
    %c19_i32_57 = arith.constant 19 : i32
    %172 = vector.broadcast %c19_i32_57 : i32 to vector<1x256xi32>
    %173 = arith.cmpi slt, %116, %172 : vector<1x256xi32>
    %174 = arith.andi %171, %173 : vector<1x256xi1>
    %175 = arith.extui %174 : vector<1x256xi1> to vector<1x256xi32>
    %176 = arith.sitofp %175 : vector<1x256xi32> to vector<1x256xf32>
    %cst_58 = arith.constant 0.000000e+00 : f32
    %177 = vector.broadcast %cst_58 : f32 to vector<4x256xf32>
    %c51_i32 = arith.constant 51 : i32
    %178 = tpu.dynamic_rotate %113 by %c51_i32 dim 1 : vector<4x256xf32>, i32 -> vector<4x256xf32>
    %179 = vector.extract_strided_slice %168 {offsets = [0, 0], sizes = [4, 1], strides = [1, 1]} : vector<4x49xf32> to vector<4x1xf32>
    %180 = vector.broadcast %179 : vector<4x1xf32> to vector<4x256xf32>
    %181 = arith.mulf %178, %180 : vector<4x256xf32>
    %182 = vector.broadcast %125 : vector<1x256xf32> to vector<4x256xf32>
    %183 = arith.mulf %181, %182 : vector<4x256xf32>
    %184 = arith.addf %177, %183 : vector<4x256xf32>
    %c50_i32 = arith.constant 50 : i32
    %185 = tpu.dynamic_rotate %113 by %c50_i32 dim 1 : vector<4x256xf32>, i32 -> vector<4x256xf32>
    %186 = vector.extract_strided_slice %168 {offsets = [0, 1], sizes = [4, 1], strides = [1, 1]} : vector<4x49xf32> to vector<4x1xf32>
    %187 = vector.broadcast %186 : vector<4x1xf32> to vector<4x256xf32>
    %188 = arith.mulf %185, %187 : vector<4x256xf32>
    %189 = vector.broadcast %132 : vector<1x256xf32> to vector<4x256xf32>
    %190 = arith.mulf %188, %189 : vector<4x256xf32>
    %191 = arith.addf %184, %190 : vector<4x256xf32>
    %c49_i32 = arith.constant 49 : i32
    %192 = tpu.dynamic_rotate %113 by %c49_i32 dim 1 : vector<4x256xf32>, i32 -> vector<4x256xf32>
    %193 = vector.extract_strided_slice %168 {offsets = [0, 2], sizes = [4, 1], strides = [1, 1]} : vector<4x49xf32> to vector<4x1xf32>
    %194 = vector.broadcast %193 : vector<4x1xf32> to vector<4x256xf32>
    %195 = arith.mulf %192, %194 : vector<4x256xf32>
    %196 = vector.broadcast %139 : vector<1x256xf32> to vector<4x256xf32>
    %197 = arith.mulf %195, %196 : vector<4x256xf32>
    %198 = arith.addf %191, %197 : vector<4x256xf32>
    %c48_i32 = arith.constant 48 : i32
    %199 = tpu.dynamic_rotate %113 by %c48_i32 dim 1 : vector<4x256xf32>, i32 -> vector<4x256xf32>
    %200 = vector.extract_strided_slice %168 {offsets = [0, 3], sizes = [4, 1], strides = [1, 1]} : vector<4x49xf32> to vector<4x1xf32>
    %201 = vector.broadcast %200 : vector<4x1xf32> to vector<4x256xf32>
    %202 = arith.mulf %199, %201 : vector<4x256xf32>
    %203 = vector.broadcast %146 : vector<1x256xf32> to vector<4x256xf32>
    %204 = arith.mulf %202, %203 : vector<4x256xf32>
    %205 = arith.addf %198, %204 : vector<4x256xf32>
    %c47_i32 = arith.constant 47 : i32
    %206 = tpu.dynamic_rotate %113 by %c47_i32 dim 1 : vector<4x256xf32>, i32 -> vector<4x256xf32>
    %207 = vector.extract_strided_slice %168 {offsets = [0, 4], sizes = [4, 1], strides = [1, 1]} : vector<4x49xf32> to vector<4x1xf32>
    %208 = vector.broadcast %207 : vector<4x1xf32> to vector<4x256xf32>
    %209 = arith.mulf %206, %208 : vector<4x256xf32>
    %210 = vector.broadcast %153 : vector<1x256xf32> to vector<4x256xf32>
    %211 = arith.mulf %209, %210 : vector<4x256xf32>
    %212 = arith.addf %205, %211 : vector<4x256xf32>
    %c46_i32 = arith.constant 46 : i32
    %213 = tpu.dynamic_rotate %113 by %c46_i32 dim 1 : vector<4x256xf32>, i32 -> vector<4x256xf32>
    %214 = vector.extract_strided_slice %168 {offsets = [0, 5], sizes = [4, 1], strides = [1, 1]} : vector<4x49xf32> to vector<4x1xf32>
    %215 = vector.broadcast %214 : vector<4x1xf32> to vector<4x256xf32>
    %216 = arith.mulf %213, %215 : vector<4x256xf32>
    %217 = vector.broadcast %160 : vector<1x256xf32> to vector<4x256xf32>
    %218 = arith.mulf %216, %217 : vector<4x256xf32>
    %219 = arith.addf %212, %218 : vector<4x256xf32>
    %c45_i32 = arith.constant 45 : i32
    %220 = tpu.dynamic_rotate %113 by %c45_i32 dim 1 : vector<4x256xf32>, i32 -> vector<4x256xf32>
    %221 = vector.extract_strided_slice %168 {offsets = [0, 6], sizes = [4, 1], strides = [1, 1]} : vector<4x49xf32> to vector<4x1xf32>
    %222 = vector.broadcast %221 : vector<4x1xf32> to vector<4x256xf32>
    %223 = arith.mulf %220, %222 : vector<4x256xf32>
    %224 = vector.broadcast %167 : vector<1x256xf32> to vector<4x256xf32>
    %225 = arith.mulf %223, %224 : vector<4x256xf32>
    %226 = arith.addf %219, %225 : vector<4x256xf32>
    %227 = vector.broadcast %176 : vector<1x256xf32> to vector<4x256xf32>
    %228 = arith.mulf %226, %227 : vector<4x256xf32>
    %229 = arith.addf %169, %228 : vector<4x256xf32>
    %c2_i32_59 = arith.constant 2 : i32
    %230 = vector.broadcast %c2_i32_59 : i32 to vector<1x256xi32>
    %231 = arith.cmpi sge, %116, %230 : vector<1x256xi32>
    %c18_i32_60 = arith.constant 18 : i32
    %232 = vector.broadcast %c18_i32_60 : i32 to vector<1x256xi32>
    %233 = arith.cmpi slt, %116, %232 : vector<1x256xi32>
    %234 = arith.andi %231, %233 : vector<1x256xi1>
    %235 = arith.extui %234 : vector<1x256xi1> to vector<1x256xi32>
    %236 = arith.sitofp %235 : vector<1x256xi32> to vector<1x256xf32>
    %cst_61 = arith.constant 0.000000e+00 : f32
    %237 = vector.broadcast %cst_61 : f32 to vector<4x256xf32>
    %c35_i32 = arith.constant 35 : i32
    %238 = tpu.dynamic_rotate %113 by %c35_i32 dim 1 : vector<4x256xf32>, i32 -> vector<4x256xf32>
    %239 = vector.extract_strided_slice %168 {offsets = [0, 7], sizes = [4, 1], strides = [1, 1]} : vector<4x49xf32> to vector<4x1xf32>
    %240 = vector.broadcast %239 : vector<4x1xf32> to vector<4x256xf32>
    %241 = arith.mulf %238, %240 : vector<4x256xf32>
    %242 = vector.broadcast %125 : vector<1x256xf32> to vector<4x256xf32>
    %243 = arith.mulf %241, %242 : vector<4x256xf32>
    %244 = arith.addf %237, %243 : vector<4x256xf32>
    %c34_i32 = arith.constant 34 : i32
    %245 = tpu.dynamic_rotate %113 by %c34_i32 dim 1 : vector<4x256xf32>, i32 -> vector<4x256xf32>
    %246 = vector.extract_strided_slice %168 {offsets = [0, 8], sizes = [4, 1], strides = [1, 1]} : vector<4x49xf32> to vector<4x1xf32>
    %247 = vector.broadcast %246 : vector<4x1xf32> to vector<4x256xf32>
    %248 = arith.mulf %245, %247 : vector<4x256xf32>
    %249 = vector.broadcast %132 : vector<1x256xf32> to vector<4x256xf32>
    %250 = arith.mulf %248, %249 : vector<4x256xf32>
    %251 = arith.addf %244, %250 : vector<4x256xf32>
    %c33_i32 = arith.constant 33 : i32
    %252 = tpu.dynamic_rotate %113 by %c33_i32 dim 1 : vector<4x256xf32>, i32 -> vector<4x256xf32>
    %253 = vector.extract_strided_slice %168 {offsets = [0, 9], sizes = [4, 1], strides = [1, 1]} : vector<4x49xf32> to vector<4x1xf32>
    %254 = vector.broadcast %253 : vector<4x1xf32> to vector<4x256xf32>
    %255 = arith.mulf %252, %254 : vector<4x256xf32>
    %256 = vector.broadcast %139 : vector<1x256xf32> to vector<4x256xf32>
    %257 = arith.mulf %255, %256 : vector<4x256xf32>
    %258 = arith.addf %251, %257 : vector<4x256xf32>
    %c32_i32 = arith.constant 32 : i32
    %259 = tpu.dynamic_rotate %113 by %c32_i32 dim 1 : vector<4x256xf32>, i32 -> vector<4x256xf32>
    %260 = vector.extract_strided_slice %168 {offsets = [0, 10], sizes = [4, 1], strides = [1, 1]} : vector<4x49xf32> to vector<4x1xf32>
    %261 = vector.broadcast %260 : vector<4x1xf32> to vector<4x256xf32>
    %262 = arith.mulf %259, %261 : vector<4x256xf32>
    %263 = vector.broadcast %146 : vector<1x256xf32> to vector<4x256xf32>
    %264 = arith.mulf %262, %263 : vector<4x256xf32>
    %265 = arith.addf %258, %264 : vector<4x256xf32>
    %c31_i32 = arith.constant 31 : i32
    %266 = tpu.dynamic_rotate %113 by %c31_i32 dim 1 : vector<4x256xf32>, i32 -> vector<4x256xf32>
    %267 = vector.extract_strided_slice %168 {offsets = [0, 11], sizes = [4, 1], strides = [1, 1]} : vector<4x49xf32> to vector<4x1xf32>
    %268 = vector.broadcast %267 : vector<4x1xf32> to vector<4x256xf32>
    %269 = arith.mulf %266, %268 : vector<4x256xf32>
    %270 = vector.broadcast %153 : vector<1x256xf32> to vector<4x256xf32>
    %271 = arith.mulf %269, %270 : vector<4x256xf32>
    %272 = arith.addf %265, %271 : vector<4x256xf32>
    %c30_i32 = arith.constant 30 : i32
    %273 = tpu.dynamic_rotate %113 by %c30_i32 dim 1 : vector<4x256xf32>, i32 -> vector<4x256xf32>
    %274 = vector.extract_strided_slice %168 {offsets = [0, 12], sizes = [4, 1], strides = [1, 1]} : vector<4x49xf32> to vector<4x1xf32>
    %275 = vector.broadcast %274 : vector<4x1xf32> to vector<4x256xf32>
    %276 = arith.mulf %273, %275 : vector<4x256xf32>
    %277 = vector.broadcast %160 : vector<1x256xf32> to vector<4x256xf32>
    %278 = arith.mulf %276, %277 : vector<4x256xf32>
    %279 = arith.addf %272, %278 : vector<4x256xf32>
    %c29_i32 = arith.constant 29 : i32
    %280 = tpu.dynamic_rotate %113 by %c29_i32 dim 1 : vector<4x256xf32>, i32 -> vector<4x256xf32>
    %281 = vector.extract_strided_slice %168 {offsets = [0, 13], sizes = [4, 1], strides = [1, 1]} : vector<4x49xf32> to vector<4x1xf32>
    %282 = vector.broadcast %281 : vector<4x1xf32> to vector<4x256xf32>
    %283 = arith.mulf %280, %282 : vector<4x256xf32>
    %284 = vector.broadcast %167 : vector<1x256xf32> to vector<4x256xf32>
    %285 = arith.mulf %283, %284 : vector<4x256xf32>
    %286 = arith.addf %279, %285 : vector<4x256xf32>
    %287 = vector.broadcast %236 : vector<1x256xf32> to vector<4x256xf32>
    %288 = arith.mulf %286, %287 : vector<4x256xf32>
    %289 = arith.addf %229, %288 : vector<4x256xf32>
    %c1_i32_62 = arith.constant 1 : i32
    %290 = vector.broadcast %c1_i32_62 : i32 to vector<1x256xi32>
    %291 = arith.cmpi sge, %116, %290 : vector<1x256xi32>
    %c17_i32_63 = arith.constant 17 : i32
    %292 = vector.broadcast %c17_i32_63 : i32 to vector<1x256xi32>
    %293 = arith.cmpi slt, %116, %292 : vector<1x256xi32>
    %294 = arith.andi %291, %293 : vector<1x256xi1>
    %295 = arith.extui %294 : vector<1x256xi1> to vector<1x256xi32>
    %296 = arith.sitofp %295 : vector<1x256xi32> to vector<1x256xf32>
    %cst_64 = arith.constant 0.000000e+00 : f32
    %297 = vector.broadcast %cst_64 : f32 to vector<4x256xf32>
    %c19_i32_65 = arith.constant 19 : i32
    %298 = tpu.dynamic_rotate %113 by %c19_i32_65 dim 1 : vector<4x256xf32>, i32 -> vector<4x256xf32>
    %299 = vector.extract_strided_slice %168 {offsets = [0, 14], sizes = [4, 1], strides = [1, 1]} : vector<4x49xf32> to vector<4x1xf32>
    %300 = vector.broadcast %299 : vector<4x1xf32> to vector<4x256xf32>
    %301 = arith.mulf %298, %300 : vector<4x256xf32>
    %302 = vector.broadcast %125 : vector<1x256xf32> to vector<4x256xf32>
    %303 = arith.mulf %301, %302 : vector<4x256xf32>
    %304 = arith.addf %297, %303 : vector<4x256xf32>
    %c18_i32_66 = arith.constant 18 : i32
    %305 = tpu.dynamic_rotate %113 by %c18_i32_66 dim 1 : vector<4x256xf32>, i32 -> vector<4x256xf32>
    %306 = vector.extract_strided_slice %168 {offsets = [0, 15], sizes = [4, 1], strides = [1, 1]} : vector<4x49xf32> to vector<4x1xf32>
    %307 = vector.broadcast %306 : vector<4x1xf32> to vector<4x256xf32>
    %308 = arith.mulf %305, %307 : vector<4x256xf32>
    %309 = vector.broadcast %132 : vector<1x256xf32> to vector<4x256xf32>
    %310 = arith.mulf %308, %309 : vector<4x256xf32>
    %311 = arith.addf %304, %310 : vector<4x256xf32>
    %c17_i32_67 = arith.constant 17 : i32
    %312 = tpu.dynamic_rotate %113 by %c17_i32_67 dim 1 : vector<4x256xf32>, i32 -> vector<4x256xf32>
    %313 = vector.extract_strided_slice %168 {offsets = [0, 16], sizes = [4, 1], strides = [1, 1]} : vector<4x49xf32> to vector<4x1xf32>
    %314 = vector.broadcast %313 : vector<4x1xf32> to vector<4x256xf32>
    %315 = arith.mulf %312, %314 : vector<4x256xf32>
    %316 = vector.broadcast %139 : vector<1x256xf32> to vector<4x256xf32>
    %317 = arith.mulf %315, %316 : vector<4x256xf32>
    %318 = arith.addf %311, %317 : vector<4x256xf32>
    %c16_i32_68 = arith.constant 16 : i32
    %319 = tpu.dynamic_rotate %113 by %c16_i32_68 dim 1 : vector<4x256xf32>, i32 -> vector<4x256xf32>
    %320 = vector.extract_strided_slice %168 {offsets = [0, 17], sizes = [4, 1], strides = [1, 1]} : vector<4x49xf32> to vector<4x1xf32>
    %321 = vector.broadcast %320 : vector<4x1xf32> to vector<4x256xf32>
    %322 = arith.mulf %319, %321 : vector<4x256xf32>
    %323 = vector.broadcast %146 : vector<1x256xf32> to vector<4x256xf32>
    %324 = arith.mulf %322, %323 : vector<4x256xf32>
    %325 = arith.addf %318, %324 : vector<4x256xf32>
    %c15_i32_69 = arith.constant 15 : i32
    %326 = tpu.dynamic_rotate %113 by %c15_i32_69 dim 1 : vector<4x256xf32>, i32 -> vector<4x256xf32>
    %327 = vector.extract_strided_slice %168 {offsets = [0, 18], sizes = [4, 1], strides = [1, 1]} : vector<4x49xf32> to vector<4x1xf32>
    %328 = vector.broadcast %327 : vector<4x1xf32> to vector<4x256xf32>
    %329 = arith.mulf %326, %328 : vector<4x256xf32>
    %330 = vector.broadcast %153 : vector<1x256xf32> to vector<4x256xf32>
    %331 = arith.mulf %329, %330 : vector<4x256xf32>
    %332 = arith.addf %325, %331 : vector<4x256xf32>
    %c14_i32_70 = arith.constant 14 : i32
    %333 = tpu.dynamic_rotate %113 by %c14_i32_70 dim 1 : vector<4x256xf32>, i32 -> vector<4x256xf32>
    %334 = vector.extract_strided_slice %168 {offsets = [0, 19], sizes = [4, 1], strides = [1, 1]} : vector<4x49xf32> to vector<4x1xf32>
    %335 = vector.broadcast %334 : vector<4x1xf32> to vector<4x256xf32>
    %336 = arith.mulf %333, %335 : vector<4x256xf32>
    %337 = vector.broadcast %160 : vector<1x256xf32> to vector<4x256xf32>
    %338 = arith.mulf %336, %337 : vector<4x256xf32>
    %339 = arith.addf %332, %338 : vector<4x256xf32>
    %c13_i32_71 = arith.constant 13 : i32
    %340 = tpu.dynamic_rotate %113 by %c13_i32_71 dim 1 : vector<4x256xf32>, i32 -> vector<4x256xf32>
    %341 = vector.extract_strided_slice %168 {offsets = [0, 20], sizes = [4, 1], strides = [1, 1]} : vector<4x49xf32> to vector<4x1xf32>
    %342 = vector.broadcast %341 : vector<4x1xf32> to vector<4x256xf32>
    %343 = arith.mulf %340, %342 : vector<4x256xf32>
    %344 = vector.broadcast %167 : vector<1x256xf32> to vector<4x256xf32>
    %345 = arith.mulf %343, %344 : vector<4x256xf32>
    %346 = arith.addf %339, %345 : vector<4x256xf32>
    %347 = vector.broadcast %296 : vector<1x256xf32> to vector<4x256xf32>
    %348 = arith.mulf %346, %347 : vector<4x256xf32>
    %349 = arith.addf %289, %348 : vector<4x256xf32>
    %c0_i32_72 = arith.constant 0 : i32
    %350 = vector.broadcast %c0_i32_72 : i32 to vector<1x256xi32>
    %351 = arith.cmpi sge, %116, %350 : vector<1x256xi32>
    %c16_i32_73 = arith.constant 16 : i32
    %352 = vector.broadcast %c16_i32_73 : i32 to vector<1x256xi32>
    %353 = arith.cmpi slt, %116, %352 : vector<1x256xi32>
    %354 = arith.andi %351, %353 : vector<1x256xi1>
    %355 = arith.extui %354 : vector<1x256xi1> to vector<1x256xi32>
    %356 = arith.sitofp %355 : vector<1x256xi32> to vector<1x256xf32>
    %cst_74 = arith.constant 0.000000e+00 : f32
    %357 = vector.broadcast %cst_74 : f32 to vector<4x256xf32>
    %c3_i32_75 = arith.constant 3 : i32
    %358 = tpu.dynamic_rotate %113 by %c3_i32_75 dim 1 : vector<4x256xf32>, i32 -> vector<4x256xf32>
    %359 = vector.extract_strided_slice %168 {offsets = [0, 21], sizes = [4, 1], strides = [1, 1]} : vector<4x49xf32> to vector<4x1xf32>
    %360 = vector.broadcast %359 : vector<4x1xf32> to vector<4x256xf32>
    %361 = arith.mulf %358, %360 : vector<4x256xf32>
    %362 = vector.broadcast %125 : vector<1x256xf32> to vector<4x256xf32>
    %363 = arith.mulf %361, %362 : vector<4x256xf32>
    %364 = arith.addf %357, %363 : vector<4x256xf32>
    %c2_i32_76 = arith.constant 2 : i32
    %365 = tpu.dynamic_rotate %113 by %c2_i32_76 dim 1 : vector<4x256xf32>, i32 -> vector<4x256xf32>
    %366 = vector.extract_strided_slice %168 {offsets = [0, 22], sizes = [4, 1], strides = [1, 1]} : vector<4x49xf32> to vector<4x1xf32>
    %367 = vector.broadcast %366 : vector<4x1xf32> to vector<4x256xf32>
    %368 = arith.mulf %365, %367 : vector<4x256xf32>
    %369 = vector.broadcast %132 : vector<1x256xf32> to vector<4x256xf32>
    %370 = arith.mulf %368, %369 : vector<4x256xf32>
    %371 = arith.addf %364, %370 : vector<4x256xf32>
    %c1_i32_77 = arith.constant 1 : i32
    %372 = tpu.dynamic_rotate %113 by %c1_i32_77 dim 1 : vector<4x256xf32>, i32 -> vector<4x256xf32>
    %373 = vector.extract_strided_slice %168 {offsets = [0, 23], sizes = [4, 1], strides = [1, 1]} : vector<4x49xf32> to vector<4x1xf32>
    %374 = vector.broadcast %373 : vector<4x1xf32> to vector<4x256xf32>
    %375 = arith.mulf %372, %374 : vector<4x256xf32>
    %376 = vector.broadcast %139 : vector<1x256xf32> to vector<4x256xf32>
    %377 = arith.mulf %375, %376 : vector<4x256xf32>
    %378 = arith.addf %371, %377 : vector<4x256xf32>
    %379 = vector.extract_strided_slice %168 {offsets = [0, 24], sizes = [4, 1], strides = [1, 1]} : vector<4x49xf32> to vector<4x1xf32>
    %380 = vector.broadcast %379 : vector<4x1xf32> to vector<4x256xf32>
    %381 = arith.mulf %113, %380 : vector<4x256xf32>
    %382 = vector.broadcast %146 : vector<1x256xf32> to vector<4x256xf32>
    %383 = arith.mulf %381, %382 : vector<4x256xf32>
    %384 = arith.addf %378, %383 : vector<4x256xf32>
    %c255_i32 = arith.constant 255 : i32
    %385 = tpu.dynamic_rotate %113 by %c255_i32 dim 1 : vector<4x256xf32>, i32 -> vector<4x256xf32>
    %386 = vector.extract_strided_slice %168 {offsets = [0, 25], sizes = [4, 1], strides = [1, 1]} : vector<4x49xf32> to vector<4x1xf32>
    %387 = vector.broadcast %386 : vector<4x1xf32> to vector<4x256xf32>
    %388 = arith.mulf %385, %387 : vector<4x256xf32>
    %389 = vector.broadcast %153 : vector<1x256xf32> to vector<4x256xf32>
    %390 = arith.mulf %388, %389 : vector<4x256xf32>
    %391 = arith.addf %384, %390 : vector<4x256xf32>
    %c254_i32 = arith.constant 254 : i32
    %392 = tpu.dynamic_rotate %113 by %c254_i32 dim 1 : vector<4x256xf32>, i32 -> vector<4x256xf32>
    %393 = vector.extract_strided_slice %168 {offsets = [0, 26], sizes = [4, 1], strides = [1, 1]} : vector<4x49xf32> to vector<4x1xf32>
    %394 = vector.broadcast %393 : vector<4x1xf32> to vector<4x256xf32>
    %395 = arith.mulf %392, %394 : vector<4x256xf32>
    %396 = vector.broadcast %160 : vector<1x256xf32> to vector<4x256xf32>
    %397 = arith.mulf %395, %396 : vector<4x256xf32>
    %398 = arith.addf %391, %397 : vector<4x256xf32>
    %c253_i32 = arith.constant 253 : i32
    %399 = tpu.dynamic_rotate %113 by %c253_i32 dim 1 : vector<4x256xf32>, i32 -> vector<4x256xf32>
    %400 = vector.extract_strided_slice %168 {offsets = [0, 27], sizes = [4, 1], strides = [1, 1]} : vector<4x49xf32> to vector<4x1xf32>
    %401 = vector.broadcast %400 : vector<4x1xf32> to vector<4x256xf32>
    %402 = arith.mulf %399, %401 : vector<4x256xf32>
    %403 = vector.broadcast %167 : vector<1x256xf32> to vector<4x256xf32>
    %404 = arith.mulf %402, %403 : vector<4x256xf32>
    %405 = arith.addf %398, %404 : vector<4x256xf32>
    %406 = vector.broadcast %356 : vector<1x256xf32> to vector<4x256xf32>
    %407 = arith.mulf %405, %406 : vector<4x256xf32>
    %408 = arith.addf %349, %407 : vector<4x256xf32>
    %c-1_i32_78 = arith.constant -1 : i32
    %409 = vector.broadcast %c-1_i32_78 : i32 to vector<1x256xi32>
    %410 = arith.cmpi sge, %116, %409 : vector<1x256xi32>
    %c15_i32_79 = arith.constant 15 : i32
    %411 = vector.broadcast %c15_i32_79 : i32 to vector<1x256xi32>
    %412 = arith.cmpi slt, %116, %411 : vector<1x256xi32>
    %413 = arith.andi %410, %412 : vector<1x256xi1>
    %414 = arith.extui %413 : vector<1x256xi1> to vector<1x256xi32>
    %415 = arith.sitofp %414 : vector<1x256xi32> to vector<1x256xf32>
    %cst_80 = arith.constant 0.000000e+00 : f32
    %416 = vector.broadcast %cst_80 : f32 to vector<4x256xf32>
    %c243_i32 = arith.constant 243 : i32
    %417 = tpu.dynamic_rotate %113 by %c243_i32 dim 1 : vector<4x256xf32>, i32 -> vector<4x256xf32>
    %418 = vector.extract_strided_slice %168 {offsets = [0, 28], sizes = [4, 1], strides = [1, 1]} : vector<4x49xf32> to vector<4x1xf32>
    %419 = vector.broadcast %418 : vector<4x1xf32> to vector<4x256xf32>
    %420 = arith.mulf %417, %419 : vector<4x256xf32>
    %421 = vector.broadcast %125 : vector<1x256xf32> to vector<4x256xf32>
    %422 = arith.mulf %420, %421 : vector<4x256xf32>
    %423 = arith.addf %416, %422 : vector<4x256xf32>
    %c242_i32 = arith.constant 242 : i32
    %424 = tpu.dynamic_rotate %113 by %c242_i32 dim 1 : vector<4x256xf32>, i32 -> vector<4x256xf32>
    %425 = vector.extract_strided_slice %168 {offsets = [0, 29], sizes = [4, 1], strides = [1, 1]} : vector<4x49xf32> to vector<4x1xf32>
    %426 = vector.broadcast %425 : vector<4x1xf32> to vector<4x256xf32>
    %427 = arith.mulf %424, %426 : vector<4x256xf32>
    %428 = vector.broadcast %132 : vector<1x256xf32> to vector<4x256xf32>
    %429 = arith.mulf %427, %428 : vector<4x256xf32>
    %430 = arith.addf %423, %429 : vector<4x256xf32>
    %c241_i32 = arith.constant 241 : i32
    %431 = tpu.dynamic_rotate %113 by %c241_i32 dim 1 : vector<4x256xf32>, i32 -> vector<4x256xf32>
    %432 = vector.extract_strided_slice %168 {offsets = [0, 30], sizes = [4, 1], strides = [1, 1]} : vector<4x49xf32> to vector<4x1xf32>
    %433 = vector.broadcast %432 : vector<4x1xf32> to vector<4x256xf32>
    %434 = arith.mulf %431, %433 : vector<4x256xf32>
    %435 = vector.broadcast %139 : vector<1x256xf32> to vector<4x256xf32>
    %436 = arith.mulf %434, %435 : vector<4x256xf32>
    %437 = arith.addf %430, %436 : vector<4x256xf32>
    %c240_i32 = arith.constant 240 : i32
    %438 = tpu.dynamic_rotate %113 by %c240_i32 dim 1 : vector<4x256xf32>, i32 -> vector<4x256xf32>
    %439 = vector.extract_strided_slice %168 {offsets = [0, 31], sizes = [4, 1], strides = [1, 1]} : vector<4x49xf32> to vector<4x1xf32>
    %440 = vector.broadcast %439 : vector<4x1xf32> to vector<4x256xf32>
    %441 = arith.mulf %438, %440 : vector<4x256xf32>
    %442 = vector.broadcast %146 : vector<1x256xf32> to vector<4x256xf32>
    %443 = arith.mulf %441, %442 : vector<4x256xf32>
    %444 = arith.addf %437, %443 : vector<4x256xf32>
    %c239_i32 = arith.constant 239 : i32
    %445 = tpu.dynamic_rotate %113 by %c239_i32 dim 1 : vector<4x256xf32>, i32 -> vector<4x256xf32>
    %446 = vector.extract_strided_slice %168 {offsets = [0, 32], sizes = [4, 1], strides = [1, 1]} : vector<4x49xf32> to vector<4x1xf32>
    %447 = vector.broadcast %446 : vector<4x1xf32> to vector<4x256xf32>
    %448 = arith.mulf %445, %447 : vector<4x256xf32>
    %449 = vector.broadcast %153 : vector<1x256xf32> to vector<4x256xf32>
    %450 = arith.mulf %448, %449 : vector<4x256xf32>
    %451 = arith.addf %444, %450 : vector<4x256xf32>
    %c238_i32 = arith.constant 238 : i32
    %452 = tpu.dynamic_rotate %113 by %c238_i32 dim 1 : vector<4x256xf32>, i32 -> vector<4x256xf32>
    %453 = vector.extract_strided_slice %168 {offsets = [0, 33], sizes = [4, 1], strides = [1, 1]} : vector<4x49xf32> to vector<4x1xf32>
    %454 = vector.broadcast %453 : vector<4x1xf32> to vector<4x256xf32>
    %455 = arith.mulf %452, %454 : vector<4x256xf32>
    %456 = vector.broadcast %160 : vector<1x256xf32> to vector<4x256xf32>
    %457 = arith.mulf %455, %456 : vector<4x256xf32>
    %458 = arith.addf %451, %457 : vector<4x256xf32>
    %c237_i32 = arith.constant 237 : i32
    %459 = tpu.dynamic_rotate %113 by %c237_i32 dim 1 : vector<4x256xf32>, i32 -> vector<4x256xf32>
    %460 = vector.extract_strided_slice %168 {offsets = [0, 34], sizes = [4, 1], strides = [1, 1]} : vector<4x49xf32> to vector<4x1xf32>
    %461 = vector.broadcast %460 : vector<4x1xf32> to vector<4x256xf32>
    %462 = arith.mulf %459, %461 : vector<4x256xf32>
    %463 = vector.broadcast %167 : vector<1x256xf32> to vector<4x256xf32>
    %464 = arith.mulf %462, %463 : vector<4x256xf32>
    %465 = arith.addf %458, %464 : vector<4x256xf32>
    %466 = vector.broadcast %415 : vector<1x256xf32> to vector<4x256xf32>
    %467 = arith.mulf %465, %466 : vector<4x256xf32>
    %468 = arith.addf %408, %467 : vector<4x256xf32>
    %c-2_i32_81 = arith.constant -2 : i32
    %469 = vector.broadcast %c-2_i32_81 : i32 to vector<1x256xi32>
    %470 = arith.cmpi sge, %116, %469 : vector<1x256xi32>
    %c14_i32_82 = arith.constant 14 : i32
    %471 = vector.broadcast %c14_i32_82 : i32 to vector<1x256xi32>
    %472 = arith.cmpi slt, %116, %471 : vector<1x256xi32>
    %473 = arith.andi %470, %472 : vector<1x256xi1>
    %474 = arith.extui %473 : vector<1x256xi1> to vector<1x256xi32>
    %475 = arith.sitofp %474 : vector<1x256xi32> to vector<1x256xf32>
    %cst_83 = arith.constant 0.000000e+00 : f32
    %476 = vector.broadcast %cst_83 : f32 to vector<4x256xf32>
    %c227_i32 = arith.constant 227 : i32
    %477 = tpu.dynamic_rotate %113 by %c227_i32 dim 1 : vector<4x256xf32>, i32 -> vector<4x256xf32>
    %478 = vector.extract_strided_slice %168 {offsets = [0, 35], sizes = [4, 1], strides = [1, 1]} : vector<4x49xf32> to vector<4x1xf32>
    %479 = vector.broadcast %478 : vector<4x1xf32> to vector<4x256xf32>
    %480 = arith.mulf %477, %479 : vector<4x256xf32>
    %481 = vector.broadcast %125 : vector<1x256xf32> to vector<4x256xf32>
    %482 = arith.mulf %480, %481 : vector<4x256xf32>
    %483 = arith.addf %476, %482 : vector<4x256xf32>
    %c226_i32 = arith.constant 226 : i32
    %484 = tpu.dynamic_rotate %113 by %c226_i32 dim 1 : vector<4x256xf32>, i32 -> vector<4x256xf32>
    %485 = vector.extract_strided_slice %168 {offsets = [0, 36], sizes = [4, 1], strides = [1, 1]} : vector<4x49xf32> to vector<4x1xf32>
    %486 = vector.broadcast %485 : vector<4x1xf32> to vector<4x256xf32>
    %487 = arith.mulf %484, %486 : vector<4x256xf32>
    %488 = vector.broadcast %132 : vector<1x256xf32> to vector<4x256xf32>
    %489 = arith.mulf %487, %488 : vector<4x256xf32>
    %490 = arith.addf %483, %489 : vector<4x256xf32>
    %c225_i32 = arith.constant 225 : i32
    %491 = tpu.dynamic_rotate %113 by %c225_i32 dim 1 : vector<4x256xf32>, i32 -> vector<4x256xf32>
    %492 = vector.extract_strided_slice %168 {offsets = [0, 37], sizes = [4, 1], strides = [1, 1]} : vector<4x49xf32> to vector<4x1xf32>
    %493 = vector.broadcast %492 : vector<4x1xf32> to vector<4x256xf32>
    %494 = arith.mulf %491, %493 : vector<4x256xf32>
    %495 = vector.broadcast %139 : vector<1x256xf32> to vector<4x256xf32>
    %496 = arith.mulf %494, %495 : vector<4x256xf32>
    %497 = arith.addf %490, %496 : vector<4x256xf32>
    %c224_i32 = arith.constant 224 : i32
    %498 = tpu.dynamic_rotate %113 by %c224_i32 dim 1 : vector<4x256xf32>, i32 -> vector<4x256xf32>
    %499 = vector.extract_strided_slice %168 {offsets = [0, 38], sizes = [4, 1], strides = [1, 1]} : vector<4x49xf32> to vector<4x1xf32>
    %500 = vector.broadcast %499 : vector<4x1xf32> to vector<4x256xf32>
    %501 = arith.mulf %498, %500 : vector<4x256xf32>
    %502 = vector.broadcast %146 : vector<1x256xf32> to vector<4x256xf32>
    %503 = arith.mulf %501, %502 : vector<4x256xf32>
    %504 = arith.addf %497, %503 : vector<4x256xf32>
    %c223_i32 = arith.constant 223 : i32
    %505 = tpu.dynamic_rotate %113 by %c223_i32 dim 1 : vector<4x256xf32>, i32 -> vector<4x256xf32>
    %506 = vector.extract_strided_slice %168 {offsets = [0, 39], sizes = [4, 1], strides = [1, 1]} : vector<4x49xf32> to vector<4x1xf32>
    %507 = vector.broadcast %506 : vector<4x1xf32> to vector<4x256xf32>
    %508 = arith.mulf %505, %507 : vector<4x256xf32>
    %509 = vector.broadcast %153 : vector<1x256xf32> to vector<4x256xf32>
    %510 = arith.mulf %508, %509 : vector<4x256xf32>
    %511 = arith.addf %504, %510 : vector<4x256xf32>
    %c222_i32 = arith.constant 222 : i32
    %512 = tpu.dynamic_rotate %113 by %c222_i32 dim 1 : vector<4x256xf32>, i32 -> vector<4x256xf32>
    %513 = vector.extract_strided_slice %168 {offsets = [0, 40], sizes = [4, 1], strides = [1, 1]} : vector<4x49xf32> to vector<4x1xf32>
    %514 = vector.broadcast %513 : vector<4x1xf32> to vector<4x256xf32>
    %515 = arith.mulf %512, %514 : vector<4x256xf32>
    %516 = vector.broadcast %160 : vector<1x256xf32> to vector<4x256xf32>
    %517 = arith.mulf %515, %516 : vector<4x256xf32>
    %518 = arith.addf %511, %517 : vector<4x256xf32>
    %c221_i32 = arith.constant 221 : i32
    %519 = tpu.dynamic_rotate %113 by %c221_i32 dim 1 : vector<4x256xf32>, i32 -> vector<4x256xf32>
    %520 = vector.extract_strided_slice %168 {offsets = [0, 41], sizes = [4, 1], strides = [1, 1]} : vector<4x49xf32> to vector<4x1xf32>
    %521 = vector.broadcast %520 : vector<4x1xf32> to vector<4x256xf32>
    %522 = arith.mulf %519, %521 : vector<4x256xf32>
    %523 = vector.broadcast %167 : vector<1x256xf32> to vector<4x256xf32>
    %524 = arith.mulf %522, %523 : vector<4x256xf32>
    %525 = arith.addf %518, %524 : vector<4x256xf32>
    %526 = vector.broadcast %475 : vector<1x256xf32> to vector<4x256xf32>
    %527 = arith.mulf %525, %526 : vector<4x256xf32>
    %528 = arith.addf %468, %527 : vector<4x256xf32>
    %c-3_i32_84 = arith.constant -3 : i32
    %529 = vector.broadcast %c-3_i32_84 : i32 to vector<1x256xi32>
    %530 = arith.cmpi sge, %116, %529 : vector<1x256xi32>
    %c13_i32_85 = arith.constant 13 : i32
    %531 = vector.broadcast %c13_i32_85 : i32 to vector<1x256xi32>
    %532 = arith.cmpi slt, %116, %531 : vector<1x256xi32>
    %533 = arith.andi %530, %532 : vector<1x256xi1>
    %534 = arith.extui %533 : vector<1x256xi1> to vector<1x256xi32>
    %535 = arith.sitofp %534 : vector<1x256xi32> to vector<1x256xf32>
    %cst_86 = arith.constant 0.000000e+00 : f32
    %536 = vector.broadcast %cst_86 : f32 to vector<4x256xf32>
    %c211_i32 = arith.constant 211 : i32
    %537 = tpu.dynamic_rotate %113 by %c211_i32 dim 1 : vector<4x256xf32>, i32 -> vector<4x256xf32>
    %538 = vector.extract_strided_slice %168 {offsets = [0, 42], sizes = [4, 1], strides = [1, 1]} : vector<4x49xf32> to vector<4x1xf32>
    %539 = vector.broadcast %538 : vector<4x1xf32> to vector<4x256xf32>
    %540 = arith.mulf %537, %539 : vector<4x256xf32>
    %541 = vector.broadcast %125 : vector<1x256xf32> to vector<4x256xf32>
    %542 = arith.mulf %540, %541 : vector<4x256xf32>
    %543 = arith.addf %536, %542 : vector<4x256xf32>
    %c210_i32 = arith.constant 210 : i32
    %544 = tpu.dynamic_rotate %113 by %c210_i32 dim 1 : vector<4x256xf32>, i32 -> vector<4x256xf32>
    %545 = vector.extract_strided_slice %168 {offsets = [0, 43], sizes = [4, 1], strides = [1, 1]} : vector<4x49xf32> to vector<4x1xf32>
    %546 = vector.broadcast %545 : vector<4x1xf32> to vector<4x256xf32>
    %547 = arith.mulf %544, %546 : vector<4x256xf32>
    %548 = vector.broadcast %132 : vector<1x256xf32> to vector<4x256xf32>
    %549 = arith.mulf %547, %548 : vector<4x256xf32>
    %550 = arith.addf %543, %549 : vector<4x256xf32>
    %c209_i32 = arith.constant 209 : i32
    %551 = tpu.dynamic_rotate %113 by %c209_i32 dim 1 : vector<4x256xf32>, i32 -> vector<4x256xf32>
    %552 = vector.extract_strided_slice %168 {offsets = [0, 44], sizes = [4, 1], strides = [1, 1]} : vector<4x49xf32> to vector<4x1xf32>
    %553 = vector.broadcast %552 : vector<4x1xf32> to vector<4x256xf32>
    %554 = arith.mulf %551, %553 : vector<4x256xf32>
    %555 = vector.broadcast %139 : vector<1x256xf32> to vector<4x256xf32>
    %556 = arith.mulf %554, %555 : vector<4x256xf32>
    %557 = arith.addf %550, %556 : vector<4x256xf32>
    %c208_i32 = arith.constant 208 : i32
    %558 = tpu.dynamic_rotate %113 by %c208_i32 dim 1 : vector<4x256xf32>, i32 -> vector<4x256xf32>
    %559 = vector.extract_strided_slice %168 {offsets = [0, 45], sizes = [4, 1], strides = [1, 1]} : vector<4x49xf32> to vector<4x1xf32>
    %560 = vector.broadcast %559 : vector<4x1xf32> to vector<4x256xf32>
    %561 = arith.mulf %558, %560 : vector<4x256xf32>
    %562 = vector.broadcast %146 : vector<1x256xf32> to vector<4x256xf32>
    %563 = arith.mulf %561, %562 : vector<4x256xf32>
    %564 = arith.addf %557, %563 : vector<4x256xf32>
    %c207_i32 = arith.constant 207 : i32
    %565 = tpu.dynamic_rotate %113 by %c207_i32 dim 1 : vector<4x256xf32>, i32 -> vector<4x256xf32>
    %566 = vector.extract_strided_slice %168 {offsets = [0, 46], sizes = [4, 1], strides = [1, 1]} : vector<4x49xf32> to vector<4x1xf32>
    %567 = vector.broadcast %566 : vector<4x1xf32> to vector<4x256xf32>
    %568 = arith.mulf %565, %567 : vector<4x256xf32>
    %569 = vector.broadcast %153 : vector<1x256xf32> to vector<4x256xf32>
    %570 = arith.mulf %568, %569 : vector<4x256xf32>
    %571 = arith.addf %564, %570 : vector<4x256xf32>
    %c206_i32 = arith.constant 206 : i32
    %572 = tpu.dynamic_rotate %113 by %c206_i32 dim 1 : vector<4x256xf32>, i32 -> vector<4x256xf32>
    %573 = vector.extract_strided_slice %168 {offsets = [0, 47], sizes = [4, 1], strides = [1, 1]} : vector<4x49xf32> to vector<4x1xf32>
    %574 = vector.broadcast %573 : vector<4x1xf32> to vector<4x256xf32>
    %575 = arith.mulf %572, %574 : vector<4x256xf32>
    %576 = vector.broadcast %160 : vector<1x256xf32> to vector<4x256xf32>
    %577 = arith.mulf %575, %576 : vector<4x256xf32>
    %578 = arith.addf %571, %577 : vector<4x256xf32>
    %c205_i32 = arith.constant 205 : i32
    %579 = tpu.dynamic_rotate %113 by %c205_i32 dim 1 : vector<4x256xf32>, i32 -> vector<4x256xf32>
    %580 = vector.extract_strided_slice %168 {offsets = [0, 48], sizes = [4, 1], strides = [1, 1]} : vector<4x49xf32> to vector<4x1xf32>
    %581 = vector.broadcast %580 : vector<4x1xf32> to vector<4x256xf32>
    %582 = arith.mulf %579, %581 : vector<4x256xf32>
    %583 = vector.broadcast %167 : vector<1x256xf32> to vector<4x256xf32>
    %584 = arith.mulf %582, %583 : vector<4x256xf32>
    %585 = arith.addf %578, %584 : vector<4x256xf32>
    %586 = vector.broadcast %535 : vector<1x256xf32> to vector<4x256xf32>
    %587 = arith.mulf %585, %586 : vector<4x256xf32>
    %588 = arith.addf %528, %587 : vector<4x256xf32>
    %589 = vector.extract_strided_slice %588 {offsets = [0, 0], sizes = [1, 256], strides = [1, 1]} : vector<4x256xf32> to vector<1x256xf32>
    %590 = vector.extract_strided_slice %588 {offsets = [1, 0], sizes = [1, 256], strides = [1, 1]} : vector<4x256xf32> to vector<1x256xf32>
    %591 = arith.addf %589, %590 : vector<1x256xf32>
    %cst_87 = arith.constant 0.999994993 : f32
    %592 = vector.broadcast %cst_87 : f32 to vector<1x256xf32>
    %593 = arith.mulf %591, %592 : vector<1x256xf32>
    %594 = arith.negf %593 : vector<1x256xf32>
    %595 = math.exp %594 : vector<1x256xf32>
    %cst_88 = arith.constant 1.000000e+00 : f32
    %596 = vector.broadcast %cst_88 : f32 to vector<1x256xf32>
    %597 = arith.addf %596, %595 : vector<1x256xf32>
    %598 = arith.divf %596, %597 : vector<1x256xf32>
    %c0_89 = arith.constant 0 : index
    %c0_90 = arith.constant 0 : index
    %c0_91 = arith.constant 0 : index
    %599 = vector.load %arg7[%c0_89, %c0_90, %c0_91] : memref<2x32x256xf32, #tpu.memory_space<vmem>>, vector<1x32x256xf32>
    %600 = vector.shape_cast %599 : vector<1x32x256xf32> to vector<32x256xf32>
    %601 = vector.broadcast %598 : vector<1x256xf32> to vector<32x256xf32>
    %602 = arith.mulf %600, %601 : vector<32x256xf32>
    %c0_92 = arith.constant 0 : index
    %c0_93 = arith.constant 0 : index
    %c0_94 = arith.constant 0 : index
    %603 = vector.load %arg7[%c0_92, %c0_93, %c0_94] : memref<2x32x256xf32, #tpu.memory_space<vmem>>, vector<1x32x256xf32>
    %604 = vector.shape_cast %603 : vector<1x32x256xf32> to vector<32x256xf32>
    %605 = vector.shape_cast %602 : vector<32x256xf32> to vector<1x32x256xf32>
    tpu.vector_store %arg7[%c0_92, %c0_93, %c0_94], %605 {strides = array<i32>} : memref<2x32x256xf32, #tpu.memory_space<vmem>>, vector<1x32x256xf32>,
    %606 = vector.extract_strided_slice %588 {offsets = [2, 0], sizes = [1, 256], strides = [1, 1]} : vector<4x256xf32> to vector<1x256xf32>
    %607 = vector.extract_strided_slice %588 {offsets = [3, 0], sizes = [1, 256], strides = [1, 1]} : vector<4x256xf32> to vector<1x256xf32>
    %608 = arith.addf %606, %607 : vector<1x256xf32>
    %cst_95 = arith.constant 0.999994993 : f32
    %609 = vector.broadcast %cst_95 : f32 to vector<1x256xf32>
    %610 = arith.mulf %608, %609 : vector<1x256xf32>
    %611 = arith.negf %610 : vector<1x256xf32>
    %612 = math.exp %611 : vector<1x256xf32>
    %cst_96 = arith.constant 1.000000e+00 : f32
    %613 = vector.broadcast %cst_96 : f32 to vector<1x256xf32>
    %614 = arith.addf %613, %612 : vector<1x256xf32>
    %615 = arith.divf %613, %614 : vector<1x256xf32>
    %c1_97 = arith.constant 1 : index
    %c0_98 = arith.constant 0 : index
    %c0_99 = arith.constant 0 : index
    %616 = vector.load %arg7[%c1_97, %c0_98, %c0_99] : memref<2x32x256xf32, #tpu.memory_space<vmem>>, vector<1x32x256xf32>
    %617 = vector.shape_cast %616 : vector<1x32x256xf32> to vector<32x256xf32>
    %618 = vector.broadcast %615 : vector<1x256xf32> to vector<32x256xf32>
    %619 = arith.mulf %617, %618 : vector<32x256xf32>
    %c1_100 = arith.constant 1 : index
    %c0_101 = arith.constant 0 : index
    %c0_102 = arith.constant 0 : index
    %620 = vector.load %arg7[%c1_100, %c0_101, %c0_102] : memref<2x32x256xf32, #tpu.memory_space<vmem>>, vector<1x32x256xf32>
    %621 = vector.shape_cast %620 : vector<1x32x256xf32> to vector<32x256xf32>
    %622 = vector.shape_cast %619 : vector<32x256xf32> to vector<1x32x256xf32>
    tpu.vector_store %arg7[%c1_100, %c0_101, %c0_102], %622 {strides = array<i32>} : memref<2x32x256xf32, #tpu.memory_space<vmem>>, vector<1x32x256xf32>,
    return
  }
  func.func @transform_0(%arg0: i32) -> (i32, i32, i32) {
    %c0_i32 = arith.constant 0 : i32
    %c0_i32_0 = arith.constant 0 : i32
    %c0_i32_1 = arith.constant 0 : i32
    return %arg0, %c0_i32, %c0_i32_0 : i32, i32, i32
  }
  func.func @transform_1(%arg0: i32) -> (i32, i32) {
    %c0_i32 = arith.constant 0 : i32
    %c0_i32_0 = arith.constant 0 : i32
    %c0_i32_1 = arith.constant 0 : i32
    return %c0_i32, %c0_i32_0 : i32, i32
  }
  func.func @transform_2(%arg0: i32) -> (i32, i32) {
    %c0_i32 = arith.constant 0 : i32
    %c0_i32_0 = arith.constant 0 : i32
    %c0_i32_1 = arith.constant 0 : i32
    return %c0_i32, %c0_i32_0 : i32, i32
  }
  func.func @transform_3(%arg0: i32) -> (i32, i32) {
    %c0_i32 = arith.constant 0 : i32
    %c0_i32_0 = arith.constant 0 : i32
    %c0_i32_1 = arith.constant 0 : i32
    return %c0_i32, %c0_i32_0 : i32, i32
  }
  func.func @transform_4(%arg0: i32) -> (i32, i32) {
    %c0_i32 = arith.constant 0 : i32
    %c0_i32_0 = arith.constant 0 : i32
    %c0_i32_1 = arith.constant 0 : i32
    return %c0_i32, %c0_i32_0 : i32, i32
  }
  func.func @transform_5(%arg0: i32) -> (i32, i32) {
    %c0_i32 = arith.constant 0 : i32
    %c0_i32_0 = arith.constant 0 : i32
    %c0_i32_1 = arith.constant 0 : i32
    return %c0_i32, %c0_i32_0 : i32, i32
  }
  func.func @transform_6(%arg0: i32) -> (i32, i32, i32) {
    %c0_i32 = arith.constant 0 : i32
    %c0_i32_0 = arith.constant 0 : i32
    %c0_i32_1 = arith.constant 0 : i32
    return %arg0, %c0_i32, %c0_i32_0 : i32, i32, i32
  }
}

</mosaic_0001>

<llo_original>
// kernel: tpu_custom_call.1
$region0: #{tpu_custom_call.1}
  #allocation0 [shape = 'u32[]', space=smem, size = 0x4, offset = 0x4, fixed_abs, tag = 'smem constant byte address 0x4 - core index']
  #allocation1 [shape = 'u32[72,128]{1,0:T(1,128)}', space=vmem, size = 0x9000, scoped, tag = 'internal scratch']
  %s0 = inlined_call_operand.hbm [shape: f32[2,32,256], index: 0, kind: input, shape index: {}]
  %s1 = inlined_call_operand.vmem [shape: f32[2,32], index: 1, kind: input, shape index: {}]
  %s2 = inlined_call_operand.vmem [shape: f32[2,1], index: 2, kind: input, shape index: {}]
  %s3 = inlined_call_operand.vmem [shape: f32[32,2], index: 3, kind: input, shape index: {}]
  %s4 = inlined_call_operand.vmem [shape: f32[32,1], index: 4, kind: input, shape index: {}]
  %s5 = inlined_call_operand.vmem [shape: f32[4,49], index: 5, kind: input, shape index: {}]
  %s6 = inlined_call_operand.hbm [shape: f32[2,32,256], index: 6, kind: output, shape index: {}]
  %s7 = sld [smem:[#allocation0]]
  $region38: #{tpu_custom_call.1} parent=0
    _
  %s9 = ssub.s32 1, %s7
  %s10 = scalar_select 0, %s9, %s7
  $region1: #{tpu_custom_call.1} parent=0
    #allocation2 [shape = 'u8[65536]{0}', space=vmem, size = 0x10000, scoped, tag = 'input window, operand 0, single buffered']
    #allocation3 [shape = 's32[1]{0}', space=sflag, size = 0x4, scoped, tag = 'scoped memory for tpu_custom_call.1']
    #allocation4 [shape = 's32[1]{0}', space=sflag, size = 0x4, scoped, tag = 'scoped memory for tpu_custom_call.1']
    #allocation5 [shape = 'u8[65536]{0}', space=vmem, size = 0x10000, scoped, tag = 'output window, operand 0, single buffered']
    %11 = vsyncpa [#allocation3], 0
    %12 = vsyncpa [#allocation4], 0
    // Predicated region
    $region2: #{tpu_custom_call.1} parent=1 // pred_check
      _
    $region3: #{tpu_custom_call.1} parent=1 // pred_check_branch
      %14 = sbr.rel (0) target = $region5
    $region4: #{tpu_custom_call.1} parent=1 // pred_region
      %16 = vsyncadd [#allocation3], 0
      %s17 = sshll.u32 %s0, 4
      %s18 = int_to_ptr.hbm [resolvable:$true] %s17
      %s19 = sshll.u32 [#allocation2], 4
      %s20 = int_to_ptr.vmem [resolvable:$true] %s19
      %25 = dma.hbm_to_vmem [thread:$0]  %s18, 2048, %s20, [#allocation3], 256, 256, 16
    $region5: #{tpu_custom_call.1} parent=1 // pred_fallthru
      _
    // Predicated region
    $region6: #{tpu_custom_call.1} parent=1 // pred_check
      _
    $region7: #{tpu_custom_call.1} parent=1 // pred_check_branch
      %27 = sbr.rel (0) target = $region9
    $region8: #{tpu_custom_call.1} parent=1 // pred_region
      _
    $region9: #{tpu_custom_call.1} parent=1 // pred_fallthru
      _
    // Predicated region
    $region10: #{tpu_custom_call.1} parent=1 // pred_check
      _
    $region11: #{tpu_custom_call.1} parent=1 // pred_check_branch
      %29 = sbr.rel (0) target = $region13
    $region12: #{tpu_custom_call.1} parent=1 // pred_region
      _
    $region13: #{tpu_custom_call.1} parent=1 // pred_fallthru
      _
    // Predicated region
    $region14: #{tpu_custom_call.1} parent=1 // pred_check
      _
    $region15: #{tpu_custom_call.1} parent=1 // pred_check_branch
      %31 = sbr.rel (0) target = $region17
    $region16: #{tpu_custom_call.1} parent=1 // pred_region
      _
    $region17: #{tpu_custom_call.1} parent=1 // pred_fallthru
      _
    // Predicated region
    $region18: #{tpu_custom_call.1} parent=1 // pred_check
      _
    $region19: #{tpu_custom_call.1} parent=1 // pred_check_branch
      %33 = sbr.rel (0) target = $region21
    $region20: #{tpu_custom_call.1} parent=1 // pred_region
      _
    $region21: #{tpu_custom_call.1} parent=1 // pred_fallthru
      _
    // Predicated region
    $region22: #{tpu_custom_call.1} parent=1 // pred_check
      _
    $region23: #{tpu_custom_call.1} parent=1 // pred_check_branch
      %35 = sbr.rel (0) target = $region25
    $region24: #{tpu_custom_call.1} parent=1 // pred_region
      _
    $region25: #{tpu_custom_call.1} parent=1 // pred_fallthru
      _
    // Predicated region
    $region26: #{tpu_custom_call.1} parent=1 // pred_check
      _
    $region27: #{tpu_custom_call.1} parent=1 // pred_check_branch
      %37 = sbr.rel (0) target = $region29
    $region28: #{tpu_custom_call.1} parent=1 // pred_region
      %39 = dma.done [#allocation3], 2048
    $region29: #{tpu_custom_call.1} parent=1 // pred_fallthru
      _
    %v40 = vlaneseq
    %v41 = vand.u32 %v40, 127
    %v42 = vld [vmem:[#allocation2] sm:$0xff]
    %v43 = vld [vmem:[#allocation2 + $0x8] sm:$0xff]
    %v44 = vld [vmem:[#allocation2 + $0x10] sm:$0xff]
    %v45 = vld [vmem:[#allocation2 + $0x18] sm:$0xff]
    %v46 = vld [vmem:[#allocation2 + $0x20] sm:$0xff]
    %v47 = vld [vmem:[#allocation2 + $0x28] sm:$0xff]
    %v48 = vld [vmem:[#allocation2 + $0x30] sm:$0xff]
    %v49 = vld [vmem:[#allocation2 + $0x38] sm:$0xff]
    %v50 = vadd.f32 %v42, %v43
    %51 = vadd.xlane.f32.xlu0 %v50
    %v52 = vpop.xlane.xlu0 %51
    %v53 = vadd.f32 %v44, %v45
    %54 = vadd.xlane.f32.xlu0 %v53
    %v55 = vpop.xlane.xlu0 %54
    %v56 = vadd.f32 %v46, %v47
    %57 = vadd.xlane.f32.xlu0 %v56
    %v58 = vpop.xlane.xlu0 %57
    %v59 = vadd.f32 %v48, %v49
    %60 = vadd.xlane.f32.xlu0 %v59
    %v61 = vpop.xlane.xlu0 %60
    %v62 = vmul.f32 %v52, 0.00390625
    %v63 = vmul.f32 %v55, 0.00390625
    %v64 = vmul.f32 %v58, 0.00390625
    %v65 = vmul.f32 %v61, 0.00390625
    %v66 = vmax.f32 %v42, %v43
    %67 = vmax.xlane.f32.xlu0 %v66
    %v68 = vpop.xlane.xlu0 %67
    %v69 = vmax.f32 %v44, %v45
    %70 = vmax.xlane.f32.xlu0 %v69
    %v71 = vpop.xlane.xlu0 %70
    %v72 = vmax.f32 %v46, %v47
    %73 = vmax.xlane.f32.xlu0 %v72
    %v74 = vpop.xlane.xlu0 %73
    %v75 = vmax.f32 %v48, %v49
    %76 = vmax.xlane.f32.xlu0 %v75
    %v77 = vpop.xlane.xlu0 %76
    %vm78 = vcmp.eq.s32.totalorder %v41, 0
    %v79 = vsel %vm78, %v62, 0.0
    %v80 = vsel %vm78, %v63, 0.0
    %v81 = vsel %vm78, %v64, 0.0
    %v82 = vsel %vm78, %v65, 0.0
    %vm83 = vcmp.eq.s32.totalorder %v41, 1
    %v84 = vsel %vm83, %v68, %v79
    %v85 = vsel %vm83, %v71, %v80
    %v86 = vsel %vm83, %v74, %v81
    %v87 = vsel %vm83, %v77, %v82
    %s88 = scalar_lea.vmem [#allocation2], 64
    %v89 = vld [vmem:[%s88] sm:$0xff]
    %v90 = vld [vmem:[%s88 + $0x8] sm:$0xff]
    %v91 = vld [vmem:[%s88 + $0x10] sm:$0xff]
    %v92 = vld [vmem:[%s88 + $0x18] sm:$0xff]
    %v93 = vld [vmem:[%s88 + $0x20] sm:$0xff]
    %v94 = vld [vmem:[%s88 + $0x28] sm:$0xff]
    %v95 = vld [vmem:[%s88 + $0x30] sm:$0xff]
    %v96 = vld [vmem:[%s88 + $0x38] sm:$0xff]
    %v97 = vadd.f32 %v89, %v90
    %98 = vadd.xlane.f32.xlu0 %v97
    %v99 = vpop.xlane.xlu0 %98
    %v100 = vadd.f32 %v91, %v92
    %101 = vadd.xlane.f32.xlu0 %v100
    %v102 = vpop.xlane.xlu0 %101
    %v103 = vadd.f32 %v93, %v94
    %104 = vadd.xlane.f32.xlu0 %v103
    %v105 = vpop.xlane.xlu0 %104
    %v106 = vadd.f32 %v95, %v96
    %107 = vadd.xlane.f32.xlu0 %v106
    %v108 = vpop.xlane.xlu0 %107
    %v109 = vmul.f32 %v99, 0.00390625
    %v110 = vmul.f32 %v102, 0.00390625
    %v111 = vmul.f32 %v105, 0.00390625
    %v112 = vmul.f32 %v108, 0.00390625
    %v113 = vmax.f32 %v89, %v90
    %114 = vmax.xlane.f32.xlu0 %v113
    %v115 = vpop.xlane.xlu0 %114
    %v116 = vmax.f32 %v91, %v92
    %117 = vmax.xlane.f32.xlu0 %v116
    %v118 = vpop.xlane.xlu0 %117
    %v119 = vmax.f32 %v93, %v94
    %120 = vmax.xlane.f32.xlu0 %v119
    %v121 = vpop.xlane.xlu0 %120
    %v122 = vmax.f32 %v95, %v96
    %123 = vmax.xlane.f32.xlu0 %v122
    %v124 = vpop.xlane.xlu0 %123
    %vm125 = vcmp.eq.s32.totalorder %v41, 2
    %v126 = vsel %vm125, %v109, %v84
    %v127 = vsel %vm125, %v110, %v85
    %v128 = vsel %vm125, %v111, %v86
    %v129 = vsel %vm125, %v112, %v87
    %vm130 = vcmp.eq.s32.totalorder %v41, 3
    %v131 = vsel %vm130, %v115, %v126
    %v132 = vsel %vm130, %v118, %v127
    %v133 = vsel %vm130, %v121, %v128
    %v134 = vsel %vm130, %v124, %v129
    %v135 = vld [vmem:[%s1] sm:$0x3]
    %v136 = vld [vmem:[%s2] sm:$0x3]
    %138 = vset.pattern.permute.xlu0 0
    %139 = vperm.xlu0 %138, %v136
    %v140 = vpop.permute.xlu0 %139
    %vm142 = vcmask 261120
    %v144 = vsel %vm142, %v135, 0
    %146 = vmatpush.msra.mxu0 0.0
    %147 = vmatpush.msra.mxu0 0.0
    %148 = vmatpush.msra.mxu0 0.0
    %149 = vmatpush.msra.mxu0 0.0
    %150 = vmatpush.msra.mxu0 0.0
    %151 = vmatpush.msra.mxu0 0.0
    %152 = vmatpush.msra.mxu0 0.0
    %153 = vmatpush.msra.mxu0 0.0
    %154 = vmatpush.msra.mxu0 0.0
    %155 = vmatpush.msra.mxu0 0.0
    %156 = vmatpush.msra.mxu0 0.0
    %157 = vmatpush.msra.mxu0 0.0
    %158 = vmatpush.msra.mxu0 %v134
    %159 = vmatpush.msra.mxu0 %v133
    %160 = vmatpush.msra.mxu0 %v132
    %161 = vmatpush.msra.mxu0 %v131
    %162 = vmatmul.f32.gmra.mxu0 %v144
    %v163 = vpop.f32.mrf.mxu0
    %v164 = vadd.f32 %v140, %v163
    %165 = vdwg.mxu0
    %v166 = vmax.f32 %v164, 0.0
    %v167 = vld [vmem:[%s3] sm:$0xff]
    %v168 = vld [vmem:[%s3 + $0x8] sm:$0xff]
    %v169 = vld [vmem:[%s3 + $0x10] sm:$0xff]
    %v170 = vld [vmem:[%s3 + $0x18] sm:$0xff]
    %v171 = vld [vmem:[%s4] sm:$0xff]
    %v172 = vld [vmem:[%s4 + $0x8] sm:$0xff]
    %v173 = vld [vmem:[%s4 + $0x10] sm:$0xff]
    %v174 = vld [vmem:[%s4 + $0x18] sm:$0xff]
    %176 = vset.pattern.permute.xlu0 0
    %177 = vperm.xlu0 %176, %v171
    %v178 = vpop.permute.xlu0 %177
    %181 = vset.pattern.permute.xlu0 0
    %182 = vperm.xlu0 %181, %v172
    %v183 = vpop.permute.xlu0 %182
    %186 = vset.pattern.permute.xlu0 0
    %187 = vperm.xlu0 %186, %v173
    %v188 = vpop.permute.xlu0 %187
    %191 = vset.pattern.permute.xlu0 0
    %192 = vperm.xlu0 %191, %v174
    %v193 = vpop.permute.xlu0 %192
    %vm195 = vcmask 15360
    %v197 = vsel %vm195, %v167, 0
    %v200 = vsel %vm195, %v168, 0
    %v203 = vsel %vm195, %v169, 0
    %v206 = vsel %vm195, %v170, 0
    %vm208 = vcmask 1041408
    %v210 = vsel %vm208, %v166, 0
    %212 = vmatpush.msra.mxu0 0.0
    %213 = vmatpush.msra.mxu0 0.0
    %214 = vmatpush.msra.mxu0 0.0
    %215 = vmatpush.msra.mxu0 0.0
    %216 = vmatpush.msra.mxu0 0.0
    %217 = vmatpush.msra.mxu0 0.0
    %218 = vmatpush.msra.mxu0 0.0
    %219 = vmatpush.msra.mxu0 0.0
    %220 = vmatpush.msra.mxu0 0.0
    %221 = vmatpush.msra.mxu0 0.0
    %222 = vmatpush.msra.mxu0 0.0
    %223 = vmatpush.msra.mxu0 0.0
    %224 = vmatpush.msra.mxu0 0.0
    %225 = vmatpush.msra.mxu0 0.0
    %226 = vmatpush.msra.mxu0 0.0
    %227 = vmatpush.msra.mxu0 %v210
    %228 = vmatmul.f32.gmra.mxu0 %v197
    %v229 = vpop.f32.mrf.mxu0
    %v230 = vadd.f32 %v178, %v229
    %231 = vmatmul.f32.gmra.mxu0 %v200
    %v232 = vpop.f32.mrf.mxu0
    %v233 = vadd.f32 %v183, %v232
    %234 = vmatmul.f32.gmra.mxu0 %v203
    %v235 = vpop.f32.mrf.mxu0
    %v236 = vadd.f32 %v188, %v235
    %237 = vmatmul.f32.gmra.mxu0 %v206
    %v238 = vpop.f32.mrf.mxu0
    %v239 = vadd.f32 %v193, %v238
    %240 = vdwg.mxu0
    %v241 = vlaneseq
    %v242 = vshrl.u32 %v241, 7
    %v243 = vsel %vm195, %v230, 0.0
    %244 = vadd.xlane.f32.xlu0 %v243
    %v245 = vpop.xlane.xlu0 %244
    %v246 = vsel %vm195, %v233, 0.0
    %247 = vadd.xlane.f32.xlu0 %v246
    %v248 = vpop.xlane.xlu0 %247
    %v249 = vsel %vm195, %v236, 0.0
    %250 = vadd.xlane.f32.xlu0 %v249
    %v251 = vpop.xlane.xlu0 %250
    %v252 = vsel %vm195, %v239, 0.0
    %253 = vadd.xlane.f32.xlu0 %v252
    %v254 = vpop.xlane.xlu0 %253
    %v255 = vxor.u32 %v245, 2147483648
    %v256 = vxor.u32 %v248, 2147483648
    %v257 = vxor.u32 %v251, 2147483648
    %v258 = vxor.u32 %v254, 2147483648
    %v259 = vmul.f32 %v255, 1.442695
    %v260 = vpow.pop %v259
    %v261 = vmul.f32 %v256, 1.442695
    %v262 = vpow.pop %v261
    %v263 = vmul.f32 %v257, 1.442695
    %v264 = vpow.pop %v263
    %v265 = vmul.f32 %v258, 1.442695
    %v266 = vpow.pop %v265
    %v267 = vadd.f32 %v260, 1.0
    %v268 = vadd.f32 %v262, 1.0
    %v269 = vadd.f32 %v264, 1.0
    %v270 = vadd.f32 %v266, 1.0
    %v271 = vrcp.pop %v267
    %v272 = vmul.f32 %v267, %v271
    %v273 = vsub.f32 1.0, %v272
    %v274 = vmul.f32 %v271, %v273
    %v275 = vadd.f32 %v271, %v274
    %vm276 = vweird.f32 %v267
    %vm277 = vweird.f32 %v271
    %vm278 = vmor %vm276, %vm277
    %v279 = vsel %vm278, %v271, %v275
    %v280 = vand.u32 2147483647, %v267
    %vm281 = vcmp.eq.f32.partialorder %v280, 8.507059e+37
    %v282 = vand.u32 %v267, 2147483648
    %v283 = vor.u32 1.1754944e-38, %v282
    %v284 = vsel %vm281, %v283, %v279
    %v285 = vmul.f32 1.0, %v284
    %v286 = vrcp.pop %v268
    %v287 = vmul.f32 %v268, %v286
    %v288 = vsub.f32 1.0, %v287
    %v289 = vmul.f32 %v286, %v288
    %v290 = vadd.f32 %v286, %v289
    %vm291 = vweird.f32 %v268
    %vm292 = vweird.f32 %v286
    %vm293 = vmor %vm291, %vm292
    %v294 = vsel %vm293, %v286, %v290
    %v295 = vand.u32 2147483647, %v268
    %vm296 = vcmp.eq.f32.partialorder %v295, 8.507059e+37
    %v297 = vand.u32 %v268, 2147483648
    %v298 = vor.u32 1.1754944e-38, %v297
    %v299 = vsel %vm296, %v298, %v294
    %v300 = vmul.f32 1.0, %v299
    %v301 = vrcp.pop %v269
    %v302 = vmul.f32 %v269, %v301
    %v303 = vsub.f32 1.0, %v302
    %v304 = vmul.f32 %v301, %v303
    %v305 = vadd.f32 %v301, %v304
    %vm306 = vweird.f32 %v269
    %vm307 = vweird.f32 %v301
    %vm308 = vmor %vm306, %vm307
    %v309 = vsel %vm308, %v301, %v305
    %v310 = vand.u32 2147483647, %v269
    %vm311 = vcmp.eq.f32.partialorder %v310, 8.507059e+37
    %v312 = vand.u32 %v269, 2147483648
    %v313 = vor.u32 1.1754944e-38, %v312
    %v314 = vsel %vm311, %v313, %v309
    %v315 = vmul.f32 1.0, %v314
    %v316 = vrcp.pop %v270
    %v317 = vmul.f32 %v270, %v316
    %v318 = vsub.f32 1.0, %v317
    %v319 = vmul.f32 %v316, %v318
    %v320 = vadd.f32 %v316, %v319
    %vm321 = vweird.f32 %v270
    %vm322 = vweird.f32 %v316
    %vm323 = vmor %vm321, %vm322
    %v324 = vsel %vm323, %v316, %v320
    %v325 = vand.u32 2147483647, %v270
    %vm326 = vcmp.eq.f32.partialorder %v325, 8.507059e+37
    %v327 = vand.u32 %v270, 2147483648
    %v328 = vor.u32 1.1754944e-38, %v327
    %v329 = vsel %vm326, %v328, %v324
    %v330 = vmul.f32 1.0, %v329
    %v331 = vmul.f32 %v42, %v285
    %v332 = vmul.f32 %v43, %v285
    %v333 = vmul.f32 %v44, %v300
    %v334 = vmul.f32 %v45, %v300
    %v335 = vmul.f32 %v46, %v315
    %v336 = vmul.f32 %v47, %v315
    %v337 = vmul.f32 %v48, %v330
    %v338 = vmul.f32 %v49, %v330
    %339 = vst [vmem:[#allocation5] sm:$0xff] %v331
    %340 = vst [vmem:[#allocation5 + $0x8] sm:$0xff] %v332
    %341 = vst [vmem:[#allocation5 + $0x10] sm:$0xff] %v333
    %342 = vst [vmem:[#allocation5 + $0x18] sm:$0xff] %v334
    %343 = vst [vmem:[#allocation5 + $0x20] sm:$0xff] %v335
    %344 = vst [vmem:[#allocation5 + $0x28] sm:$0xff] %v336
    %345 = vst [vmem:[#allocation5 + $0x30] sm:$0xff] %v337
    %346 = vst [vmem:[#allocation5 + $0x38] sm:$0xff] %v338
    %v347 = vmax.f32 %v331, %v335
    %v348 = vmax.f32 %v333, %v337
    %v349 = vmax.f32 %v347, %v348
    %v350 = vrot.slane %v349, 4
    %v351 = vmax.f32 %v349, %v350
    %v352 = vrot.slane %v351, 2
    %v353 = vmax.f32 %v351, %v352
    %v354 = vrot.slane %v353, 1
    %v355 = vmax.f32 %v353, %v354
    %v356 = vmax.f32 %v332, %v336
    %v357 = vmax.f32 %v334, %v338
    %v358 = vmax.f32 %v356, %v357
    %v359 = vrot.slane %v358, 4
    %v360 = vmax.f32 %v358, %v359
    %v361 = vrot.slane %v360, 2
    %v362 = vmax.f32 %v360, %v361
    %v363 = vrot.slane %v362, 1
    %v364 = vmax.f32 %v362, %v363
    %v365 = vadd.f32 %v331, %v333
    %v366 = vadd.f32 %v365, %v335
    %v367 = vadd.f32 %v366, %v337
    %v368 = vrot.slane %v367, 4
    %v369 = vadd.f32 %v367, %v368
    %v370 = vrot.slane %v369, 2
    %v371 = vadd.f32 %v369, %v370
    %v372 = vrot.slane %v371, 1
    %v373 = vadd.f32 %v371, %v372
    %v374 = vadd.f32 %v332, %v334
    %v375 = vadd.f32 %v374, %v336
    %v376 = vadd.f32 %v375, %v338
    %v377 = vrot.slane %v376, 4
    %v378 = vadd.f32 %v376, %v377
    %v379 = vrot.slane %v378, 2
    %v380 = vadd.f32 %v378, %v379
    %v381 = vrot.slane %v380, 1
    %v382 = vadd.f32 %v380, %v381
    %v383 = vmul.f32 %v373, 0.03125
    %v384 = vmul.f32 %v382, 0.03125
    %vm385 = vcmp.eq.s32.totalorder %v242, 0
    %v386 = vsel %vm385, %v355, 0.0
    %v387 = vsel %vm385, %v364, 0.0
    %vm388 = vcmp.eq.s32.totalorder %v242, 1
    %v389 = vsel %vm388, %v383, %v386
    %v390 = vsel %vm388, %v384, %v387
    %395 = vrot.lane.b32.xlu0 %v230, 126
    %v396 = vpop.permute.xlu0 %395
    %397 = vrot.lane.b32.xlu0 %v233, 126
    %v398 = vpop.permute.xlu0 %397
    %399 = vrot.lane.b32.xlu0 %v236, 126
    %v400 = vpop.permute.xlu0 %399
    %401 = vrot.lane.b32.xlu0 %v239, 126
    %v402 = vpop.permute.xlu0 %401
    %v407 = vsel %vm195, %v396, 0.0
    %408 = vadd.xlane.f32.xlu0 %v407
    %v409 = vpop.xlane.xlu0 %408
    %v410 = vsel %vm195, %v398, 0.0
    %411 = vadd.xlane.f32.xlu0 %v410
    %v412 = vpop.xlane.xlu0 %411
    %v413 = vsel %vm195, %v400, 0.0
    %414 = vadd.xlane.f32.xlu0 %v413
    %v415 = vpop.xlane.xlu0 %414
    %v416 = vsel %vm195, %v402, 0.0
    %417 = vadd.xlane.f32.xlu0 %v416
    %v418 = vpop.xlane.xlu0 %417
    %v419 = vxor.u32 %v409, 2147483648
    %v420 = vxor.u32 %v412, 2147483648
    %v421 = vxor.u32 %v415, 2147483648
    %v422 = vxor.u32 %v418, 2147483648
    %v423 = vmul.f32 %v419, 1.442695
    %v424 = vpow.pop %v423
    %v425 = vmul.f32 %v420, 1.442695
    %v426 = vpow.pop %v425
    %v427 = vmul.f32 %v421, 1.442695
    %v428 = vpow.pop %v427
    %v429 = vmul.f32 %v422, 1.442695
    %v430 = vpow.pop %v429
    %v431 = vadd.f32 %v424, 1.0
    %v432 = vadd.f32 %v426, 1.0
    %v433 = vadd.f32 %v428, 1.0
    %v434 = vadd.f32 %v430, 1.0
    %v435 = vrcp.pop %v431
    %v436 = vmul.f32 %v431, %v435
    %v437 = vsub.f32 1.0, %v436
    %v438 = vmul.f32 %v435, %v437
    %v439 = vadd.f32 %v435, %v438
    %vm440 = vweird.f32 %v431
    %vm441 = vweird.f32 %v435
    %vm442 = vmor %vm440, %vm441
    %v443 = vsel %vm442, %v435, %v439
    %v444 = vand.u32 2147483647, %v431
    %vm445 = vcmp.eq.f32.partialorder %v444, 8.507059e+37
    %v446 = vand.u32 %v431, 2147483648
    %v447 = vor.u32 1.1754944e-38, %v446
    %v448 = vsel %vm445, %v447, %v443
    %v449 = vmul.f32 1.0, %v448
    %v450 = vrcp.pop %v432
    %v451 = vmul.f32 %v432, %v450
    %v452 = vsub.f32 1.0, %v451
    %v453 = vmul.f32 %v450, %v452
    %v454 = vadd.f32 %v450, %v453
    %vm455 = vweird.f32 %v432
    %vm456 = vweird.f32 %v450
    %vm457 = vmor %vm455, %vm456
    %v458 = vsel %vm457, %v450, %v454
    %v459 = vand.u32 2147483647, %v432
    %vm460 = vcmp.eq.f32.partialorder %v459, 8.507059e+37
    %v461 = vand.u32 %v432, 2147483648
    %v462 = vor.u32 1.1754944e-38, %v461
    %v463 = vsel %vm460, %v462, %v458
    %v464 = vmul.f32 1.0, %v463
    %v465 = vrcp.pop %v433
    %v466 = vmul.f32 %v433, %v465
    %v467 = vsub.f32 1.0, %v466
    %v468 = vmul.f32 %v465, %v467
    %v469 = vadd.f32 %v465, %v468
    %vm470 = vweird.f32 %v433
    %vm471 = vweird.f32 %v465
    %vm472 = vmor %vm470, %vm471
    %v473 = vsel %vm472, %v465, %v469
    %v474 = vand.u32 2147483647, %v433
    %vm475 = vcmp.eq.f32.partialorder %v474, 8.507059e+37
    %v476 = vand.u32 %v433, 2147483648
    %v477 = vor.u32 1.1754944e-38, %v476
    %v478 = vsel %vm475, %v477, %v473
    %v479 = vmul.f32 1.0, %v478
    %v480 = vrcp.pop %v434
    %v481 = vmul.f32 %v434, %v480
    %v482 = vsub.f32 1.0, %v481
    %v483 = vmul.f32 %v480, %v482
    %v484 = vadd.f32 %v480, %v483
    %vm485 = vweird.f32 %v434
    %vm486 = vweird.f32 %v480
    %vm487 = vmor %vm485, %vm486
    %v488 = vsel %vm487, %v480, %v484
    %v489 = vand.u32 2147483647, %v434
    %vm490 = vcmp.eq.f32.partialorder %v489, 8.507059e+37
    %v491 = vand.u32 %v434, 2147483648
    %v492 = vor.u32 1.1754944e-38, %v491
    %v493 = vsel %vm490, %v492, %v488
    %v494 = vmul.f32 1.0, %v493
    %v495 = vld [vmem:[%s88] sm:$0xff]
    %v496 = vld [vmem:[%s88 + $0x8] sm:$0xff]
    %v497 = vld [vmem:[%s88 + $0x10] sm:$0xff]
    %v498 = vld [vmem:[%s88 + $0x18] sm:$0xff]
    %v499 = vld [vmem:[%s88 + $0x20] sm:$0xff]
    %v500 = vld [vmem:[%s88 + $0x28] sm:$0xff]
    %v501 = vld [vmem:[%s88 + $0x30] sm:$0xff]
    %v502 = vld [vmem:[%s88 + $0x38] sm:$0xff]
    %v503 = vmul.f32 %v495, %v449
    %v504 = vmul.f32 %v496, %v449
    %v505 = vmul.f32 %v497, %v464
    %v506 = vmul.f32 %v498, %v464
    %v507 = vmul.f32 %v499, %v479
    %v508 = vmul.f32 %v500, %v479
    %v509 = vmul.f32 %v501, %v494
    %v510 = vmul.f32 %v502, %v494
    %s511 = scalar_lea.vmem [#allocation5], 64
    %512 = vst [vmem:[%s511] sm:$0xff] %v503
    %513 = vst [vmem:[%s511 + $0x8] sm:$0xff] %v504
    %514 = vst [vmem:[%s511 + $0x10] sm:$0xff] %v505
    %515 = vst [vmem:[%s511 + $0x18] sm:$0xff] %v506
    %516 = vst [vmem:[%s511 + $0x20] sm:$0xff] %v507
    %517 = vst [vmem:[%s511 + $0x28] sm:$0xff] %v508
    %518 = vst [vmem:[%s511 + $0x30] sm:$0xff] %v509
    %519 = vst [vmem:[%s511 + $0x38] sm:$0xff] %v510
    %v520 = vmax.f32 %v503, %v507
    %v521 = vmax.f32 %v505, %v509
    %v522 = vmax.f32 %v520, %v521
    %v523 = vrot.slane %v522, 4
    %v524 = vmax.f32 %v522, %v523
    %v525 = vrot.slane %v524, 2
    %v526 = vmax.f32 %v524, %v525
    %v527 = vrot.slane %v526, 1
    %v528 = vmax.f32 %v526, %v527
    %v529 = vmax.f32 %v504, %v508
    %v530 = vmax.f32 %v506, %v510
    %v531 = vmax.f32 %v529, %v530
    %v532 = vrot.slane %v531, 4
    %v533 = vmax.f32 %v531, %v532
    %v534 = vrot.slane %v533, 2
    %v535 = vmax.f32 %v533, %v534
    %v536 = vrot.slane %v535, 1
    %v537 = vmax.f32 %v535, %v536
    %v538 = vadd.f32 %v503, %v505
    %v539 = vadd.f32 %v538, %v507
    %v540 = vadd.f32 %v539, %v509
    %v541 = vrot.slane %v540, 4
    %v542 = vadd.f32 %v540, %v541
    %v543 = vrot.slane %v542, 2
    %v544 = vadd.f32 %v542, %v543
    %v545 = vrot.slane %v544, 1
    %v546 = vadd.f32 %v544, %v545
    %v547 = vadd.f32 %v504, %v506
    %v548 = vadd.f32 %v547, %v508
    %v549 = vadd.f32 %v548, %v510
    %v550 = vrot.slane %v549, 4
    %v551 = vadd.f32 %v549, %v550
    %v552 = vrot.slane %v551, 2
    %v553 = vadd.f32 %v551, %v552
    %v554 = vrot.slane %v553, 1
    %v555 = vadd.f32 %v553, %v554
    %v556 = vmul.f32 %v546, 0.03125
    %v557 = vmul.f32 %v555, 0.03125
    %vm558 = vcmp.eq.s32.totalorder %v242, 2
    %v559 = vsel %vm558, %v528, %v389
    %v560 = vsel %vm558, %v537, %v390
    %vm561 = vcmp.eq.s32.totalorder %v242, 3
    %v562 = vsel %vm561, %v556, %v559
    %v563 = vsel %vm561, %v557, %v560
    %v564 = vadd.s32 %v41, 128
    %v565 = vshra.s32 %v41, 4
    %v566 = vshra.s32 %v564, 4
    %v567 = vand.u32 %v41, 15
    %v568 = vand.u32 %v564, 15
    %vm569 = vcmp.ge.s32.totalorder %v567, 3
    %vm570 = vcmp.ge.s32.totalorder %v568, 3
    %vm571 = vcmp.lt.s32.totalorder %v567, 19
    %vm572 = vcmp.lt.s32.totalorder %v568, 19
    %vm573 = vmand %vm569, %vm571
    %vm574 = vmand %vm570, %vm572
    %v575 = vsel %vm573, 1, 0
    %v576 = vsel %vm574, 1, 0
    %v577 = vcvt.s32.f32 %v575
    %v578 = vcvt.s32.f32 %v576
    %vm579 = vcmp.ge.s32.totalorder %v567, 2
    %vm580 = vcmp.ge.s32.totalorder %v568, 2
    %vm581 = vcmp.lt.s32.totalorder %v567, 18
    %vm582 = vcmp.lt.s32.totalorder %v568, 18
    %vm583 = vmand %vm579, %vm581
    %vm584 = vmand %vm580, %vm582
    %v585 = vsel %vm583, 1, 0
    %v586 = vsel %vm584, 1, 0
    %v587 = vcvt.s32.f32 %v585
    %v588 = vcvt.s32.f32 %v586
    %vm589 = vcmp.ge.s32.totalorder %v567, 1
    %vm590 = vcmp.ge.s32.totalorder %v568, 1
    %vm591 = vcmp.lt.s32.totalorder %v567, 17
    %vm592 = vcmp.lt.s32.totalorder %v568, 17
    %vm593 = vmand %vm589, %vm591
    %vm594 = vmand %vm590, %vm592
    %v595 = vsel %vm593, 1, 0
    %v596 = vsel %vm594, 1, 0
    %v597 = vcvt.s32.f32 %v595
    %v598 = vcvt.s32.f32 %v596
    %vm599 = vcmp.ge.s32.totalorder %v567, 0
    %vm600 = vcmp.ge.s32.totalorder %v568, 0
    %vm601 = vcmp.lt.s32.totalorder %v567, 16
    %vm602 = vcmp.lt.s32.totalorder %v568, 16
    %vm603 = vmand %vm599, %vm601
    %vm604 = vmand %vm600, %vm602
    %v605 = vsel %vm603, 1, 0
    %v606 = vsel %vm604, 1, 0
    %v607 = vcvt.s32.f32 %v605
    %v608 = vcvt.s32.f32 %v606
    %vm609 = vcmp.ge.s32.totalorder %v567, 4294967295
    %vm610 = vcmp.ge.s32.totalorder %v568, 4294967295
    %vm611 = vcmp.lt.s32.totalorder %v567, 15
    %vm612 = vcmp.lt.s32.totalorder %v568, 15
    %vm613 = vmand %vm609, %vm611
    %vm614 = vmand %vm610, %vm612
    %v615 = vsel %vm613, 1, 0
    %v616 = vsel %vm614, 1, 0
    %v617 = vcvt.s32.f32 %v615
    %v618 = vcvt.s32.f32 %v616
    %vm619 = vcmp.ge.s32.totalorder %v567, 4294967294
    %vm620 = vcmp.ge.s32.totalorder %v568, 4294967294
    %vm621 = vcmp.lt.s32.totalorder %v567, 14
    %vm622 = vcmp.lt.s32.totalorder %v568, 14
    %vm623 = vmand %vm619, %vm621
    %vm624 = vmand %vm620, %vm622
    %v625 = vsel %vm623, 1, 0
    %v626 = vsel %vm624, 1, 0
    %v627 = vcvt.s32.f32 %v625
    %v628 = vcvt.s32.f32 %v626
    %vm629 = vcmp.ge.s32.totalorder %v567, 4294967293
    %vm630 = vcmp.ge.s32.totalorder %v568, 4294967293
    %vm631 = vcmp.lt.s32.totalorder %v567, 13
    %vm632 = vcmp.lt.s32.totalorder %v568, 13
    %vm633 = vmand %vm629, %vm631
    %vm634 = vmand %vm630, %vm632
    %v635 = vsel %vm633, 1, 0
    %v636 = vsel %vm634, 1, 0
    %v637 = vcvt.s32.f32 %v635
    %v638 = vcvt.s32.f32 %v636
    %v639 = vld [vmem:[%s5] sm:$0xf]
    %vm640 = vcmp.ge.s32.totalorder %v565, 3
    %vm641 = vcmp.ge.s32.totalorder %v566, 3
    %vm642 = vcmp.lt.s32.totalorder %v565, 19
    %vm643 = vcmp.lt.s32.totalorder %v566, 19
    %vm644 = vmand %vm640, %vm642
    %vm645 = vmand %vm641, %vm643
    %v646 = vsel %vm644, 1, 0
    %v647 = vsel %vm645, 1, 0
    %v648 = vcvt.s32.f32 %v646
    %v649 = vcvt.s32.f32 %v647
    %650 = vrot.lane.b32.xlu0 %v562, 51
    %v651 = vpop.permute.xlu0 %650
    %652 = vrot.lane.b32.xlu0 %v563, 51
    %v653 = vpop.permute.xlu0 %652
    %vm654 = vcmp.lt.s32.totalorder %v41, 51
    %v655 = vsel %vm654, %v651, %v653
    %v656 = vsel %vm654, %v653, %v651
    %658 = vset.pattern.permute.xlu0 0
    %659 = vperm.xlu0 %658, %v639
    %v660 = vpop.permute.xlu0 %659
    %v662 = vmul.f32 %v656, %v660
    %v663 = vmul.f32 %v655, %v660
    %v664 = vmul.f32 %v662, %v577
    %v665 = vmul.f32 %v663, %v578
    %v666 = vadd.f32 %v664, 0.0
    %v667 = vadd.f32 %v665, 0.0
    %668 = vrot.lane.b32.xlu0 %v562, 50
    %v669 = vpop.permute.xlu0 %668
    %670 = vrot.lane.b32.xlu0 %v563, 50
    %v671 = vpop.permute.xlu0 %670
    %vm672 = vcmp.lt.s32.totalorder %v41, 50
    %v673 = vsel %vm672, %v669, %v671
    %v674 = vsel %vm672, %v671, %v669
    %675 = vset.pattern.permute.xlu0 1
    %676 = vperm.xlu0 %675, %v639
    %v677 = vpop.permute.xlu0 %676
    %v679 = vmul.f32 %v674, %v677
    %v680 = vmul.f32 %v673, %v677
    %v681 = vmul.f32 %v679, %v587
    %v682 = vmul.f32 %v680, %v588
    %v683 = vadd.f32 %v666, %v681
    %v684 = vadd.f32 %v667, %v682
    %685 = vrot.lane.b32.xlu0 %v562, 49
    %v686 = vpop.permute.xlu0 %685
    %687 = vrot.lane.b32.xlu0 %v563, 49
    %v688 = vpop.permute.xlu0 %687
    %vm689 = vcmp.lt.s32.totalorder %v41, 49
    %v690 = vsel %vm689, %v686, %v688
    %v691 = vsel %vm689, %v688, %v686
    %692 = vset.pattern.permute.xlu0 2
    %693 = vperm.xlu0 %692, %v639
    %v694 = vpop.permute.xlu0 %693
    %v696 = vmul.f32 %v691, %v694
    %v697 = vmul.f32 %v690, %v694
    %v698 = vmul.f32 %v696, %v597
    %v699 = vmul.f32 %v697, %v598
    %v700 = vadd.f32 %v683, %v698
    %v701 = vadd.f32 %v684, %v699
    %702 = vrot.lane.b32.xlu0 %v562, 48
    %v703 = vpop.permute.xlu0 %702
    %704 = vrot.lane.b32.xlu0 %v563, 48
    %v705 = vpop.permute.xlu0 %704
    %vm706 = vcmp.lt.s32.totalorder %v41, 48
    %v707 = vsel %vm706, %v703, %v705
    %v708 = vsel %vm706, %v705, %v703
    %709 = vset.pattern.permute.xlu0 3
    %710 = vperm.xlu0 %709, %v639
    %v711 = vpop.permute.xlu0 %710
    %v713 = vmul.f32 %v708, %v711
    %v714 = vmul.f32 %v707, %v711
    %v715 = vmul.f32 %v713, %v607
    %v716 = vmul.f32 %v714, %v608
    %v717 = vadd.f32 %v700, %v715
    %v718 = vadd.f32 %v701, %v716
    %719 = vrot.lane.b32.xlu0 %v562, 47
    %v720 = vpop.permute.xlu0 %719
    %721 = vrot.lane.b32.xlu0 %v563, 47
    %v722 = vpop.permute.xlu0 %721
    %vm723 = vcmp.lt.s32.totalorder %v41, 47
    %v724 = vsel %vm723, %v720, %v722
    %v725 = vsel %vm723, %v722, %v720
    %726 = vset.pattern.permute.xlu0 4
    %727 = vperm.xlu0 %726, %v639
    %v728 = vpop.permute.xlu0 %727
    %v730 = vmul.f32 %v725, %v728
    %v731 = vmul.f32 %v724, %v728
    %v732 = vmul.f32 %v730, %v617
    %v733 = vmul.f32 %v731, %v618
    %v734 = vadd.f32 %v717, %v732
    %v735 = vadd.f32 %v718, %v733
    %736 = vrot.lane.b32.xlu0 %v562, 46
    %v737 = vpop.permute.xlu0 %736
    %738 = vrot.lane.b32.xlu0 %v563, 46
    %v739 = vpop.permute.xlu0 %738
    %vm740 = vcmp.lt.s32.totalorder %v41, 46
    %v741 = vsel %vm740, %v737, %v739
    %v742 = vsel %vm740, %v739, %v737
    %743 = vset.pattern.permute.xlu0 5
    %744 = vperm.xlu0 %743, %v639
    %v745 = vpop.permute.xlu0 %744
    %v747 = vmul.f32 %v742, %v745
    %v748 = vmul.f32 %v741, %v745
    %v749 = vmul.f32 %v747, %v627
    %v750 = vmul.f32 %v748, %v628
    %v751 = vadd.f32 %v734, %v749
    %v752 = vadd.f32 %v735, %v750
    %753 = vrot.lane.b32.xlu0 %v562, 45
    %v754 = vpop.permute.xlu0 %753
    %755 = vrot.lane.b32.xlu0 %v563, 45
    %v756 = vpop.permute.xlu0 %755
    %vm757 = vcmp.lt.s32.totalorder %v41, 45
    %v758 = vsel %vm757, %v754, %v756
    %v759 = vsel %vm757, %v756, %v754
    %760 = vset.pattern.permute.xlu0 6
    %761 = vperm.xlu0 %760, %v639
    %v762 = vpop.permute.xlu0 %761
    %v764 = vmul.f32 %v759, %v762
    %v765 = vmul.f32 %v758, %v762
    %v766 = vmul.f32 %v764, %v637
    %v767 = vmul.f32 %v765, %v638
    %v768 = vadd.f32 %v751, %v766
    %v769 = vadd.f32 %v752, %v767
    %v770 = vmul.f32 %v768, %v648
    %v771 = vmul.f32 %v769, %v649
    %v772 = vadd.f32 %v770, 0.0
    %v773 = vadd.f32 %v771, 0.0
    %vm774 = vcmp.ge.s32.totalorder %v565, 2
    %vm775 = vcmp.ge.s32.totalorder %v566, 2
    %vm776 = vcmp.lt.s32.totalorder %v565, 18
    %vm777 = vcmp.lt.s32.totalorder %v566, 18
    %vm778 = vmand %vm774, %vm776
    %vm779 = vmand %vm775, %vm777
    %v780 = vsel %vm778, 1, 0
    %v781 = vsel %vm779, 1, 0
    %v782 = vcvt.s32.f32 %v780
    %v783 = vcvt.s32.f32 %v781
    %784 = vrot.lane.b32.xlu0 %v562, 35
    %v785 = vpop.permute.xlu0 %784
    %786 = vrot.lane.b32.xlu0 %v563, 35
    %v787 = vpop.permute.xlu0 %786
    %vm788 = vcmp.lt.s32.totalorder %v41, 35
    %v789 = vsel %vm788, %v785, %v787
    %v790 = vsel %vm788, %v787, %v785
    %791 = vset.pattern.permute.xlu0 7
    %792 = vperm.xlu0 %791, %v639
    %v793 = vpop.permute.xlu0 %792
    %v795 = vmul.f32 %v790, %v793
    %v796 = vmul.f32 %v789, %v793
    %v797 = vmul.f32 %v795, %v577
    %v798 = vmul.f32 %v796, %v578
    %v799 = vadd.f32 %v797, 0.0
    %v800 = vadd.f32 %v798, 0.0
    %801 = vrot.lane.b32.xlu0 %v562, 34
    %v802 = vpop.permute.xlu0 %801
    %803 = vrot.lane.b32.xlu0 %v563, 34
    %v804 = vpop.permute.xlu0 %803
    %vm805 = vcmp.lt.s32.totalorder %v41, 34
    %v806 = vsel %vm805, %v802, %v804
    %v807 = vsel %vm805, %v804, %v802
    %808 = vset.pattern.permute.xlu0 8
    %809 = vperm.xlu0 %808, %v639
    %v810 = vpop.permute.xlu0 %809
    %v812 = vmul.f32 %v807, %v810
    %v813 = vmul.f32 %v806, %v810
    %v814 = vmul.f32 %v812, %v587
    %v815 = vmul.f32 %v813, %v588
    %v816 = vadd.f32 %v799, %v814
    %v817 = vadd.f32 %v800, %v815
    %818 = vrot.lane.b32.xlu0 %v562, 33
    %v819 = vpop.permute.xlu0 %818
    %820 = vrot.lane.b32.xlu0 %v563, 33
    %v821 = vpop.permute.xlu0 %820
    %vm822 = vcmp.lt.s32.totalorder %v41, 33
    %v823 = vsel %vm822, %v819, %v821
    %v824 = vsel %vm822, %v821, %v819
    %825 = vset.pattern.permute.xlu0 9
    %826 = vperm.xlu0 %825, %v639
    %v827 = vpop.permute.xlu0 %826
    %v829 = vmul.f32 %v824, %v827
    %v830 = vmul.f32 %v823, %v827
    %v831 = vmul.f32 %v829, %v597
    %v832 = vmul.f32 %v830, %v598
    %v833 = vadd.f32 %v816, %v831
    %v834 = vadd.f32 %v817, %v832
    %835 = vrot.lane.b32.xlu0 %v562, 32
    %v836 = vpop.permute.xlu0 %835
    %837 = vrot.lane.b32.xlu0 %v563, 32
    %v838 = vpop.permute.xlu0 %837
    %vm839 = vcmp.lt.s32.totalorder %v41, 32
    %v840 = vsel %vm839, %v836, %v838
    %v841 = vsel %vm839, %v838, %v836
    %842 = vset.pattern.permute.xlu0 10
    %843 = vperm.xlu0 %842, %v639
    %v844 = vpop.permute.xlu0 %843
    %v846 = vmul.f32 %v841, %v844
    %v847 = vmul.f32 %v840, %v844
    %v848 = vmul.f32 %v846, %v607
    %v849 = vmul.f32 %v847, %v608
    %v850 = vadd.f32 %v833, %v848
    %v851 = vadd.f32 %v834, %v849
    %852 = vrot.lane.b32.xlu0 %v562, 31
    %v853 = vpop.permute.xlu0 %852
    %854 = vrot.lane.b32.xlu0 %v563, 31
    %v855 = vpop.permute.xlu0 %854
    %vm856 = vcmp.lt.s32.totalorder %v41, 31
    %v857 = vsel %vm856, %v853, %v855
    %v858 = vsel %vm856, %v855, %v853
    %859 = vset.pattern.permute.xlu0 11
    %860 = vperm.xlu0 %859, %v639
    %v861 = vpop.permute.xlu0 %860
    %v863 = vmul.f32 %v858, %v861
    %v864 = vmul.f32 %v857, %v861
    %v865 = vmul.f32 %v863, %v617
    %v866 = vmul.f32 %v864, %v618
    %v867 = vadd.f32 %v850, %v865
    %v868 = vadd.f32 %v851, %v866
    %869 = vrot.lane.b32.xlu0 %v562, 30
    %v870 = vpop.permute.xlu0 %869
    %871 = vrot.lane.b32.xlu0 %v563, 30
    %v872 = vpop.permute.xlu0 %871
    %vm873 = vcmp.lt.s32.totalorder %v41, 30
    %v874 = vsel %vm873, %v870, %v872
    %v875 = vsel %vm873, %v872, %v870
    %876 = vset.pattern.permute.xlu0 12
    %877 = vperm.xlu0 %876, %v639
    %v878 = vpop.permute.xlu0 %877
    %v880 = vmul.f32 %v875, %v878
    %v881 = vmul.f32 %v874, %v878
    %v882 = vmul.f32 %v880, %v627
    %v883 = vmul.f32 %v881, %v628
    %v884 = vadd.f32 %v867, %v882
    %v885 = vadd.f32 %v868, %v883
    %886 = vrot.lane.b32.xlu0 %v562, 29
    %v887 = vpop.permute.xlu0 %886
    %888 = vrot.lane.b32.xlu0 %v563, 29
    %v889 = vpop.permute.xlu0 %888
    %vm890 = vcmp.lt.s32.totalorder %v41, 29
    %v891 = vsel %vm890, %v887, %v889
    %v892 = vsel %vm890, %v889, %v887
    %893 = vset.pattern.permute.xlu0 13
    %894 = vperm.xlu0 %893, %v639
    %v895 = vpop.permute.xlu0 %894
    %v897 = vmul.f32 %v892, %v895
    %v898 = vmul.f32 %v891, %v895
    %v899 = vmul.f32 %v897, %v637
    %v900 = vmul.f32 %v898, %v638
    %v901 = vadd.f32 %v884, %v899
    %v902 = vadd.f32 %v885, %v900
    %v903 = vmul.f32 %v901, %v782
    %v904 = vmul.f32 %v902, %v783
    %v905 = vadd.f32 %v772, %v903
    %v906 = vadd.f32 %v773, %v904
    %vm907 = vcmp.ge.s32.totalorder %v565, 1
    %vm908 = vcmp.ge.s32.totalorder %v566, 1
    %vm909 = vcmp.lt.s32.totalorder %v565, 17
    %vm910 = vcmp.lt.s32.totalorder %v566, 17
    %vm911 = vmand %vm907, %vm909
    %vm912 = vmand %vm908, %vm910
    %v913 = vsel %vm911, 1, 0
    %v914 = vsel %vm912, 1, 0
    %v915 = vcvt.s32.f32 %v913
    %v916 = vcvt.s32.f32 %v914
    %917 = vrot.lane.b32.xlu0 %v562, 19
    %v918 = vpop.permute.xlu0 %917
    %919 = vrot.lane.b32.xlu0 %v563, 19
    %v920 = vpop.permute.xlu0 %919
    %vm921 = vcmp.lt.s32.totalorder %v41, 19
    %v922 = vsel %vm921, %v918, %v920
    %v923 = vsel %vm921, %v920, %v918
    %924 = vset.pattern.permute.xlu0 14
    %925 = vperm.xlu0 %924, %v639
    %v926 = vpop.permute.xlu0 %925
    %v928 = vmul.f32 %v923, %v926
    %v929 = vmul.f32 %v922, %v926
    %v930 = vmul.f32 %v928, %v577
    %v931 = vmul.f32 %v929, %v578
    %v932 = vadd.f32 %v930, 0.0
    %v933 = vadd.f32 %v931, 0.0
    %934 = vrot.lane.b32.xlu0 %v562, 18
    %v935 = vpop.permute.xlu0 %934
    %936 = vrot.lane.b32.xlu0 %v563, 18
    %v937 = vpop.permute.xlu0 %936
    %vm938 = vcmp.lt.s32.totalorder %v41, 18
    %v939 = vsel %vm938, %v935, %v937
    %v940 = vsel %vm938, %v937, %v935
    %941 = vset.pattern.permute.xlu0 15
    %942 = vperm.xlu0 %941, %v639
    %v943 = vpop.permute.xlu0 %942
    %v945 = vmul.f32 %v940, %v943
    %v946 = vmul.f32 %v939, %v943
    %v947 = vmul.f32 %v945, %v587
    %v948 = vmul.f32 %v946, %v588
    %v949 = vadd.f32 %v932, %v947
    %v950 = vadd.f32 %v933, %v948
    %951 = vrot.lane.b32.xlu0 %v562, 17
    %v952 = vpop.permute.xlu0 %951
    %953 = vrot.lane.b32.xlu0 %v563, 17
    %v954 = vpop.permute.xlu0 %953
    %vm955 = vcmp.lt.s32.totalorder %v41, 17
    %v956 = vsel %vm955, %v952, %v954
    %v957 = vsel %vm955, %v954, %v952
    %958 = vset.pattern.permute.xlu0 16
    %959 = vperm.xlu0 %958, %v639
    %v960 = vpop.permute.xlu0 %959
    %v962 = vmul.f32 %v957, %v960
    %v963 = vmul.f32 %v956, %v960
    %v964 = vmul.f32 %v962, %v597
    %v965 = vmul.f32 %v963, %v598
    %v966 = vadd.f32 %v949, %v964
    %v967 = vadd.f32 %v950, %v965
    %968 = vrot.lane.b32.xlu0 %v562, 16
    %v969 = vpop.permute.xlu0 %968
    %970 = vrot.lane.b32.xlu0 %v563, 16
    %v971 = vpop.permute.xlu0 %970
    %vm972 = vcmp.lt.s32.totalorder %v41, 16
    %v973 = vsel %vm972, %v969, %v971
    %v974 = vsel %vm972, %v971, %v969
    %975 = vset.pattern.permute.xlu0 17
    %976 = vperm.xlu0 %975, %v639
    %v977 = vpop.permute.xlu0 %976
    %v979 = vmul.f32 %v974, %v977
    %v980 = vmul.f32 %v973, %v977
    %v981 = vmul.f32 %v979, %v607
    %v982 = vmul.f32 %v980, %v608
    %v983 = vadd.f32 %v966, %v981
    %v984 = vadd.f32 %v967, %v982
    %985 = vrot.lane.b32.xlu0 %v562, 15
    %v986 = vpop.permute.xlu0 %985
    %987 = vrot.lane.b32.xlu0 %v563, 15
    %v988 = vpop.permute.xlu0 %987
    %vm989 = vcmp.lt.s32.totalorder %v41, 15
    %v990 = vsel %vm989, %v986, %v988
    %v991 = vsel %vm989, %v988, %v986
    %992 = vset.pattern.permute.xlu0 18
    %993 = vperm.xlu0 %992, %v639
    %v994 = vpop.permute.xlu0 %993
    %v996 = vmul.f32 %v991, %v994
    %v997 = vmul.f32 %v990, %v994
    %v998 = vmul.f32 %v996, %v617
    %v999 = vmul.f32 %v997, %v618
    %v1000 = vadd.f32 %v983, %v998
    %v1001 = vadd.f32 %v984, %v999
    %1002 = vrot.lane.b32.xlu0 %v562, 14
    %v1003 = vpop.permute.xlu0 %1002
    %1004 = vrot.lane.b32.xlu0 %v563, 14
    %v1005 = vpop.permute.xlu0 %1004
    %vm1006 = vcmp.lt.s32.totalorder %v41, 14
    %v1007 = vsel %vm1006, %v1003, %v1005
    %v1008 = vsel %vm1006, %v1005, %v1003
    %1009 = vset.pattern.permute.xlu0 19
    %1010 = vperm.xlu0 %1009, %v639
    %v1011 = vpop.permute.xlu0 %1010
    %v1013 = vmul.f32 %v1008, %v1011
    %v1014 = vmul.f32 %v1007, %v1011
    %v1015 = vmul.f32 %v1013, %v627
    %v1016 = vmul.f32 %v1014, %v628
    %v1017 = vadd.f32 %v1000, %v1015
    %v1018 = vadd.f32 %v1001, %v1016
    %1019 = vrot.lane.b32.xlu0 %v562, 13
    %v1020 = vpop.permute.xlu0 %1019
    %1021 = vrot.lane.b32.xlu0 %v563, 13
    %v1022 = vpop.permute.xlu0 %1021
    %vm1023 = vcmp.lt.s32.totalorder %v41, 13
    %v1024 = vsel %vm1023, %v1020, %v1022
    %v1025 = vsel %vm1023, %v1022, %v1020
    %1026 = vset.pattern.permute.xlu0 20
    %1027 = vperm.xlu0 %1026, %v639
    %v1028 = vpop.permute.xlu0 %1027
    %v1030 = vmul.f32 %v1025, %v1028
    %v1031 = vmul.f32 %v1024, %v1028
    %v1032 = vmul.f32 %v1030, %v637
    %v1033 = vmul.f32 %v1031, %v638
    %v1034 = vadd.f32 %v1017, %v1032
    %v1035 = vadd.f32 %v1018, %v1033
    %v1036 = vmul.f32 %v1034, %v915
    %v1037 = vmul.f32 %v1035, %v916
    %v1038 = vadd.f32 %v905, %v1036
    %v1039 = vadd.f32 %v906, %v1037
    %vm1040 = vcmp.ge.s32.totalorder %v565, 0
    %vm1041 = vcmp.ge.s32.totalorder %v566, 0
    %vm1042 = vcmp.lt.s32.totalorder %v565, 16
    %vm1043 = vcmp.lt.s32.totalorder %v566, 16
    %vm1044 = vmand %vm1040, %vm1042
    %vm1045 = vmand %vm1041, %vm1043
    %v1046 = vsel %vm1044, 1, 0
    %v1047 = vsel %vm1045, 1, 0
    %v1048 = vcvt.s32.f32 %v1046
    %v1049 = vcvt.s32.f32 %v1047
    %1050 = vrot.lane.b32.xlu0 %v562, 3
    %v1051 = vpop.permute.xlu0 %1050
    %1052 = vrot.lane.b32.xlu0 %v563, 3
    %v1053 = vpop.permute.xlu0 %1052
    %vm1054 = vcmp.lt.s32.totalorder %v41, 3
    %v1055 = vsel %vm1054, %v1051, %v1053
    %v1056 = vsel %vm1054, %v1053, %v1051
    %1057 = vset.pattern.permute.xlu0 21
    %1058 = vperm.xlu0 %1057, %v639
    %v1059 = vpop.permute.xlu0 %1058
    %v1061 = vmul.f32 %v1056, %v1059
    %v1062 = vmul.f32 %v1055, %v1059
    %v1063 = vmul.f32 %v1061, %v577
    %v1064 = vmul.f32 %v1062, %v578
    %v1065 = vadd.f32 %v1063, 0.0
    %v1066 = vadd.f32 %v1064, 0.0
    %1067 = vrot.lane.b32.xlu0 %v562, 2
    %v1068 = vpop.permute.xlu0 %1067
    %1069 = vrot.lane.b32.xlu0 %v563, 2
    %v1070 = vpop.permute.xlu0 %1069
    %vm1071 = vcmp.lt.s32.totalorder %v41, 2
    %v1072 = vsel %vm1071, %v1068, %v1070
    %v1073 = vsel %vm1071, %v1070, %v1068
    %1074 = vset.pattern.permute.xlu0 22
    %1075 = vperm.xlu0 %1074, %v639
    %v1076 = vpop.permute.xlu0 %1075
    %v1078 = vmul.f32 %v1073, %v1076
    %v1079 = vmul.f32 %v1072, %v1076
    %v1080 = vmul.f32 %v1078, %v587
    %v1081 = vmul.f32 %v1079, %v588
    %v1082 = vadd.f32 %v1065, %v1080
    %v1083 = vadd.f32 %v1066, %v1081
    %1084 = vrot.lane.b32.xlu0 %v562, 1
    %v1085 = vpop.permute.xlu0 %1084
    %1086 = vrot.lane.b32.xlu0 %v563, 1
    %v1087 = vpop.permute.xlu0 %1086
    %vm1088 = vcmp.lt.s32.totalorder %v41, 1
    %v1089 = vsel %vm1088, %v1085, %v1087
    %v1090 = vsel %vm1088, %v1087, %v1085
    %1091 = vset.pattern.permute.xlu0 23
    %1092 = vperm.xlu0 %1091, %v639
    %v1093 = vpop.permute.xlu0 %1092
    %v1095 = vmul.f32 %v1090, %v1093
    %v1096 = vmul.f32 %v1089, %v1093
    %v1097 = vmul.f32 %v1095, %v597
    %v1098 = vmul.f32 %v1096, %v598
    %v1099 = vadd.f32 %v1082, %v1097
    %v1100 = vadd.f32 %v1083, %v1098
    %1101 = vset.pattern.permute.xlu0 24
    %1102 = vperm.xlu0 %1101, %v639
    %v1103 = vpop.permute.xlu0 %1102
    %v1105 = vmul.f32 %v562, %v1103
    %v1106 = vmul.f32 %v563, %v1103
    %v1107 = vmul.f32 %v1105, %v607
    %v1108 = vmul.f32 %v1106, %v608
    %v1109 = vadd.f32 %v1099, %v1107
    %v1110 = vadd.f32 %v1100, %v1108
    %1111 = vrot.lane.b32.xlu0 %v562, 127
    %v1112 = vpop.permute.xlu0 %1111
    %1113 = vrot.lane.b32.xlu0 %v563, 127
    %v1114 = vpop.permute.xlu0 %1113
    %vm1115 = vcmp.lt.s32.totalorder %v41, 127
    %v1116 = vsel %vm1115, %v1112, %v1114
    %v1117 = vsel %vm1115, %v1114, %v1112
    %1118 = vset.pattern.permute.xlu0 25
    %1119 = vperm.xlu0 %1118, %v639
    %v1120 = vpop.permute.xlu0 %1119
    %v1122 = vmul.f32 %v1116, %v1120
    %v1123 = vmul.f32 %v1117, %v1120
    %v1124 = vmul.f32 %v1122, %v617
    %v1125 = vmul.f32 %v1123, %v618
    %v1126 = vadd.f32 %v1109, %v1124
    %v1127 = vadd.f32 %v1110, %v1125
    %1128 = vrot.lane.b32.xlu0 %v562, 126
    %v1129 = vpop.permute.xlu0 %1128
    %1130 = vrot.lane.b32.xlu0 %v563, 126
    %v1131 = vpop.permute.xlu0 %1130
    %vm1132 = vcmp.lt.s32.totalorder %v41, 126
    %v1133 = vsel %vm1132, %v1129, %v1131
    %v1134 = vsel %vm1132, %v1131, %v1129
    %1135 = vset.pattern.permute.xlu0 26
    %1136 = vperm.xlu0 %1135, %v639
    %v1137 = vpop.permute.xlu0 %1136
    %v1139 = vmul.f32 %v1133, %v1137
    %v1140 = vmul.f32 %v1134, %v1137
    %v1141 = vmul.f32 %v1139, %v627
    %v1142 = vmul.f32 %v1140, %v628
    %v1143 = vadd.f32 %v1126, %v1141
    %v1144 = vadd.f32 %v1127, %v1142
    %1145 = vrot.lane.b32.xlu0 %v562, 125
    %v1146 = vpop.permute.xlu0 %1145
    %1147 = vrot.lane.b32.xlu0 %v563, 125
    %v1148 = vpop.permute.xlu0 %1147
    %vm1149 = vcmp.lt.s32.totalorder %v41, 125
    %v1150 = vsel %vm1149, %v1146, %v1148
    %v1151 = vsel %vm1149, %v1148, %v1146
    %1152 = vset.pattern.permute.xlu0 27
    %1153 = vperm.xlu0 %1152, %v639
    %v1154 = vpop.permute.xlu0 %1153
    %v1156 = vmul.f32 %v1150, %v1154
    %v1157 = vmul.f32 %v1151, %v1154
    %v1158 = vmul.f32 %v1156, %v637
    %v1159 = vmul.f32 %v1157, %v638
    %v1160 = vadd.f32 %v1143, %v1158
    %v1161 = vadd.f32 %v1144, %v1159
    %v1162 = vmul.f32 %v1160, %v1048
    %v1163 = vmul.f32 %v1161, %v1049
    %v1164 = vadd.f32 %v1038, %v1162
    %v1165 = vadd.f32 %v1039, %v1163
    %vm1166 = vcmp.ge.s32.totalorder %v565, 4294967295
    %vm1167 = vcmp.ge.s32.totalorder %v566, 4294967295
    %vm1168 = vcmp.lt.s32.totalorder %v565, 15
    %vm1169 = vcmp.lt.s32.totalorder %v566, 15
    %vm1170 = vmand %vm1166, %vm1168
    %vm1171 = vmand %vm1167, %vm1169
    %v1172 = vsel %vm1170, 1, 0
    %v1173 = vsel %vm1171, 1, 0
    %v1174 = vcvt.s32.f32 %v1172
    %v1175 = vcvt.s32.f32 %v1173
    %1176 = vrot.lane.b32.xlu0 %v562, 115
    %v1177 = vpop.permute.xlu0 %1176
    %1178 = vrot.lane.b32.xlu0 %v563, 115
    %v1179 = vpop.permute.xlu0 %1178
    %vm1180 = vcmp.lt.s32.totalorder %v41, 115
    %v1181 = vsel %vm1180, %v1177, %v1179
    %v1182 = vsel %vm1180, %v1179, %v1177
    %1183 = vset.pattern.permute.xlu0 28
    %1184 = vperm.xlu0 %1183, %v639
    %v1185 = vpop.permute.xlu0 %1184
    %v1187 = vmul.f32 %v1181, %v1185
    %v1188 = vmul.f32 %v1182, %v1185
    %v1189 = vmul.f32 %v1187, %v577
    %v1190 = vmul.f32 %v1188, %v578
    %v1191 = vadd.f32 %v1189, 0.0
    %v1192 = vadd.f32 %v1190, 0.0
    %1193 = vrot.lane.b32.xlu0 %v562, 114
    %v1194 = vpop.permute.xlu0 %1193
    %1195 = vrot.lane.b32.xlu0 %v563, 114
    %v1196 = vpop.permute.xlu0 %1195
    %vm1197 = vcmp.lt.s32.totalorder %v41, 114
    %v1198 = vsel %vm1197, %v1194, %v1196
    %v1199 = vsel %vm1197, %v1196, %v1194
    %1200 = vset.pattern.permute.xlu0 29
    %1201 = vperm.xlu0 %1200, %v639
    %v1202 = vpop.permute.xlu0 %1201
    %v1204 = vmul.f32 %v1198, %v1202
    %v1205 = vmul.f32 %v1199, %v1202
    %v1206 = vmul.f32 %v1204, %v587
    %v1207 = vmul.f32 %v1205, %v588
    %v1208 = vadd.f32 %v1191, %v1206
    %v1209 = vadd.f32 %v1192, %v1207
    %1210 = vrot.lane.b32.xlu0 %v562, 113
    %v1211 = vpop.permute.xlu0 %1210
    %1212 = vrot.lane.b32.xlu0 %v563, 113
    %v1213 = vpop.permute.xlu0 %1212
    %vm1214 = vcmp.lt.s32.totalorder %v41, 113
    %v1215 = vsel %vm1214, %v1211, %v1213
    %v1216 = vsel %vm1214, %v1213, %v1211
    %1217 = vset.pattern.permute.xlu0 30
    %1218 = vperm.xlu0 %1217, %v639
    %v1219 = vpop.permute.xlu0 %1218
    %v1221 = vmul.f32 %v1215, %v1219
    %v1222 = vmul.f32 %v1216, %v1219
    %v1223 = vmul.f32 %v1221, %v597
    %v1224 = vmul.f32 %v1222, %v598
    %v1225 = vadd.f32 %v1208, %v1223
    %v1226 = vadd.f32 %v1209, %v1224
    %1227 = vrot.lane.b32.xlu0 %v562, 112
    %v1228 = vpop.permute.xlu0 %1227
    %1229 = vrot.lane.b32.xlu0 %v563, 112
    %v1230 = vpop.permute.xlu0 %1229
    %vm1231 = vcmp.lt.s32.totalorder %v41, 112
    %v1232 = vsel %vm1231, %v1228, %v1230
    %v1233 = vsel %vm1231, %v1230, %v1228
    %1234 = vset.pattern.permute.xlu0 31
    %1235 = vperm.xlu0 %1234, %v639
    %v1236 = vpop.permute.xlu0 %1235
    %v1238 = vmul.f32 %v1232, %v1236
    %v1239 = vmul.f32 %v1233, %v1236
    %v1240 = vmul.f32 %v1238, %v607
    %v1241 = vmul.f32 %v1239, %v608
    %v1242 = vadd.f32 %v1225, %v1240
    %v1243 = vadd.f32 %v1226, %v1241
    %1244 = vrot.lane.b32.xlu0 %v562, 111
    %v1245 = vpop.permute.xlu0 %1244
    %1246 = vrot.lane.b32.xlu0 %v563, 111
    %v1247 = vpop.permute.xlu0 %1246
    %vm1248 = vcmp.lt.s32.totalorder %v41, 111
    %v1249 = vsel %vm1248, %v1245, %v1247
    %v1250 = vsel %vm1248, %v1247, %v1245
    %1251 = vset.pattern.permute.xlu0 32
    %1252 = vperm.xlu0 %1251, %v639
    %v1253 = vpop.permute.xlu0 %1252
    %v1255 = vmul.f32 %v1249, %v1253
    %v1256 = vmul.f32 %v1250, %v1253
    %v1257 = vmul.f32 %v1255, %v617
    %v1258 = vmul.f32 %v1256, %v618
    %v1259 = vadd.f32 %v1242, %v1257
    %v1260 = vadd.f32 %v1243, %v1258
    %1261 = vrot.lane.b32.xlu0 %v562, 110
    %v1262 = vpop.permute.xlu0 %1261
    %1263 = vrot.lane.b32.xlu0 %v563, 110
    %v1264 = vpop.permute.xlu0 %1263
    %vm1265 = vcmp.lt.s32.totalorder %v41, 110
    %v1266 = vsel %vm1265, %v1262, %v1264
    %v1267 = vsel %vm1265, %v1264, %v1262
    %1268 = vset.pattern.permute.xlu0 33
    %1269 = vperm.xlu0 %1268, %v639
    %v1270 = vpop.permute.xlu0 %1269
    %v1272 = vmul.f32 %v1266, %v1270
    %v1273 = vmul.f32 %v1267, %v1270
    %v1274 = vmul.f32 %v1272, %v627
    %v1275 = vmul.f32 %v1273, %v628
    %v1276 = vadd.f32 %v1259, %v1274
    %v1277 = vadd.f32 %v1260, %v1275
    %1278 = vrot.lane.b32.xlu0 %v562, 109
    %v1279 = vpop.permute.xlu0 %1278
    %1280 = vrot.lane.b32.xlu0 %v563, 109
    %v1281 = vpop.permute.xlu0 %1280
    %vm1282 = vcmp.lt.s32.totalorder %v41, 109
    %v1283 = vsel %vm1282, %v1279, %v1281
    %v1284 = vsel %vm1282, %v1281, %v1279
    %1285 = vset.pattern.permute.xlu0 34
    %1286 = vperm.xlu0 %1285, %v639
    %v1287 = vpop.permute.xlu0 %1286
    %v1289 = vmul.f32 %v1283, %v1287
    %v1290 = vmul.f32 %v1284, %v1287
    %v1291 = vmul.f32 %v1289, %v637
    %v1292 = vmul.f32 %v1290, %v638
    %v1293 = vadd.f32 %v1276, %v1291
    %v1294 = vadd.f32 %v1277, %v1292
    %v1295 = vmul.f32 %v1293, %v1174
    %v1296 = vmul.f32 %v1294, %v1175
    %v1297 = vadd.f32 %v1164, %v1295
    %v1298 = vadd.f32 %v1165, %v1296
    %vm1299 = vcmp.ge.s32.totalorder %v565, 4294967294
    %vm1300 = vcmp.ge.s32.totalorder %v566, 4294967294
    %vm1301 = vcmp.lt.s32.totalorder %v565, 14
    %vm1302 = vcmp.lt.s32.totalorder %v566, 14
    %vm1303 = vmand %vm1299, %vm1301
    %vm1304 = vmand %vm1300, %vm1302
    %v1305 = vsel %vm1303, 1, 0
    %v1306 = vsel %vm1304, 1, 0
    %v1307 = vcvt.s32.f32 %v1305
    %v1308 = vcvt.s32.f32 %v1306
    %1309 = vrot.lane.b32.xlu0 %v562, 99
    %v1310 = vpop.permute.xlu0 %1309
    %1311 = vrot.lane.b32.xlu0 %v563, 99
    %v1312 = vpop.permute.xlu0 %1311
    %vm1313 = vcmp.lt.s32.totalorder %v41, 99
    %v1314 = vsel %vm1313, %v1310, %v1312
    %v1315 = vsel %vm1313, %v1312, %v1310
    %1316 = vset.pattern.permute.xlu0 35
    %1317 = vperm.xlu0 %1316, %v639
    %v1318 = vpop.permute.xlu0 %1317
    %v1320 = vmul.f32 %v1314, %v1318
    %v1321 = vmul.f32 %v1315, %v1318
    %v1322 = vmul.f32 %v1320, %v577
    %v1323 = vmul.f32 %v1321, %v578
    %v1324 = vadd.f32 %v1322, 0.0
    %v1325 = vadd.f32 %v1323, 0.0
    %1326 = vrot.lane.b32.xlu0 %v562, 98
    %v1327 = vpop.permute.xlu0 %1326
    %1328 = vrot.lane.b32.xlu0 %v563, 98
    %v1329 = vpop.permute.xlu0 %1328
    %vm1330 = vcmp.lt.s32.totalorder %v41, 98
    %v1331 = vsel %vm1330, %v1327, %v1329
    %v1332 = vsel %vm1330, %v1329, %v1327
    %1333 = vset.pattern.permute.xlu0 36
    %1334 = vperm.xlu0 %1333, %v639
    %v1335 = vpop.permute.xlu0 %1334
    %v1337 = vmul.f32 %v1331, %v1335
    %v1338 = vmul.f32 %v1332, %v1335
    %v1339 = vmul.f32 %v1337, %v587
    %v1340 = vmul.f32 %v1338, %v588
    %v1341 = vadd.f32 %v1324, %v1339
    %v1342 = vadd.f32 %v1325, %v1340
    %1343 = vrot.lane.b32.xlu0 %v562, 97
    %v1344 = vpop.permute.xlu0 %1343
    %1345 = vrot.lane.b32.xlu0 %v563, 97
    %v1346 = vpop.permute.xlu0 %1345
    %vm1347 = vcmp.lt.s32.totalorder %v41, 97
    %v1348 = vsel %vm1347, %v1344, %v1346
    %v1349 = vsel %vm1347, %v1346, %v1344
    %1350 = vset.pattern.permute.xlu0 37
    %1351 = vperm.xlu0 %1350, %v639
    %v1352 = vpop.permute.xlu0 %1351
    %v1354 = vmul.f32 %v1348, %v1352
    %v1355 = vmul.f32 %v1349, %v1352
    %v1356 = vmul.f32 %v1354, %v597
    %v1357 = vmul.f32 %v1355, %v598
    %v1358 = vadd.f32 %v1341, %v1356
    %v1359 = vadd.f32 %v1342, %v1357
    %1360 = vrot.lane.b32.xlu0 %v562, 96
    %v1361 = vpop.permute.xlu0 %1360
    %1362 = vrot.lane.b32.xlu0 %v563, 96
    %v1363 = vpop.permute.xlu0 %1362
    %vm1364 = vcmp.lt.s32.totalorder %v41, 96
    %v1365 = vsel %vm1364, %v1361, %v1363
    %v1366 = vsel %vm1364, %v1363, %v1361
    %1367 = vset.pattern.permute.xlu0 38
    %1368 = vperm.xlu0 %1367, %v639
    %v1369 = vpop.permute.xlu0 %1368
    %v1371 = vmul.f32 %v1365, %v1369
    %v1372 = vmul.f32 %v1366, %v1369
    %v1373 = vmul.f32 %v1371, %v607
    %v1374 = vmul.f32 %v1372, %v608
    %v1375 = vadd.f32 %v1358, %v1373
    %v1376 = vadd.f32 %v1359, %v1374
    %1377 = vrot.lane.b32.xlu0 %v562, 95
    %v1378 = vpop.permute.xlu0 %1377
    %1379 = vrot.lane.b32.xlu0 %v563, 95
    %v1380 = vpop.permute.xlu0 %1379
    %vm1381 = vcmp.lt.s32.totalorder %v41, 95
    %v1382 = vsel %vm1381, %v1378, %v1380
    %v1383 = vsel %vm1381, %v1380, %v1378
    %1384 = vset.pattern.permute.xlu0 39
    %1385 = vperm.xlu0 %1384, %v639
    %v1386 = vpop.permute.xlu0 %1385
    %v1388 = vmul.f32 %v1382, %v1386
    %v1389 = vmul.f32 %v1383, %v1386
    %v1390 = vmul.f32 %v1388, %v617
    %v1391 = vmul.f32 %v1389, %v618
    %v1392 = vadd.f32 %v1375, %v1390
    %v1393 = vadd.f32 %v1376, %v1391
    %1394 = vrot.lane.b32.xlu0 %v562, 94
    %v1395 = vpop.permute.xlu0 %1394
    %1396 = vrot.lane.b32.xlu0 %v563, 94
    %v1397 = vpop.permute.xlu0 %1396
    %vm1398 = vcmp.lt.s32.totalorder %v41, 94
    %v1399 = vsel %vm1398, %v1395, %v1397
    %v1400 = vsel %vm1398, %v1397, %v1395
    %1401 = vset.pattern.permute.xlu0 40
    %1402 = vperm.xlu0 %1401, %v639
    %v1403 = vpop.permute.xlu0 %1402
    %v1405 = vmul.f32 %v1399, %v1403
    %v1406 = vmul.f32 %v1400, %v1403
    %v1407 = vmul.f32 %v1405, %v627
    %v1408 = vmul.f32 %v1406, %v628
    %v1409 = vadd.f32 %v1392, %v1407
    %v1410 = vadd.f32 %v1393, %v1408
    %1411 = vrot.lane.b32.xlu0 %v562, 93
    %v1412 = vpop.permute.xlu0 %1411
    %1413 = vrot.lane.b32.xlu0 %v563, 93
    %v1414 = vpop.permute.xlu0 %1413
    %vm1415 = vcmp.lt.s32.totalorder %v41, 93
    %v1416 = vsel %vm1415, %v1412, %v1414
    %v1417 = vsel %vm1415, %v1414, %v1412
    %1418 = vset.pattern.permute.xlu0 41
    %1419 = vperm.xlu0 %1418, %v639
    %v1420 = vpop.permute.xlu0 %1419
    %v1422 = vmul.f32 %v1416, %v1420
    %v1423 = vmul.f32 %v1417, %v1420
    %v1424 = vmul.f32 %v1422, %v637
    %v1425 = vmul.f32 %v1423, %v638
    %v1426 = vadd.f32 %v1409, %v1424
    %v1427 = vadd.f32 %v1410, %v1425
    %v1428 = vmul.f32 %v1426, %v1307
    %v1429 = vmul.f32 %v1427, %v1308
    %v1430 = vadd.f32 %v1297, %v1428
    %v1431 = vadd.f32 %v1298, %v1429
    %vm1432 = vcmp.ge.s32.totalorder %v565, 4294967293
    %vm1433 = vcmp.ge.s32.totalorder %v566, 4294967293
    %vm1434 = vcmp.lt.s32.totalorder %v565, 13
    %vm1435 = vcmp.lt.s32.totalorder %v566, 13
    %vm1436 = vmand %vm1432, %vm1434
    %vm1437 = vmand %vm1433, %vm1435
    %v1438 = vsel %vm1436, 1, 0
    %v1439 = vsel %vm1437, 1, 0
    %v1440 = vcvt.s32.f32 %v1438
    %v1441 = vcvt.s32.f32 %v1439
    %1442 = vrot.lane.b32.xlu0 %v562, 83
    %v1443 = vpop.permute.xlu0 %1442
    %1444 = vrot.lane.b32.xlu0 %v563, 83
    %v1445 = vpop.permute.xlu0 %1444
    %vm1446 = vcmp.lt.s32.totalorder %v41, 83
    %v1447 = vsel %vm1446, %v1443, %v1445
    %v1448 = vsel %vm1446, %v1445, %v1443
    %1449 = vset.pattern.permute.xlu0 42
    %1450 = vperm.xlu0 %1449, %v639
    %v1451 = vpop.permute.xlu0 %1450
    %v1453 = vmul.f32 %v1447, %v1451
    %v1454 = vmul.f32 %v1448, %v1451
    %v1455 = vmul.f32 %v1453, %v577
    %v1456 = vmul.f32 %v1454, %v578
    %v1457 = vadd.f32 %v1455, 0.0
    %v1458 = vadd.f32 %v1456, 0.0
    %1459 = vrot.lane.b32.xlu0 %v562, 82
    %v1460 = vpop.permute.xlu0 %1459
    %1461 = vrot.lane.b32.xlu0 %v563, 82
    %v1462 = vpop.permute.xlu0 %1461
    %vm1463 = vcmp.lt.s32.totalorder %v41, 82
    %v1464 = vsel %vm1463, %v1460, %v1462
    %v1465 = vsel %vm1463, %v1462, %v1460
    %1466 = vset.pattern.permute.xlu0 43
    %1467 = vperm.xlu0 %1466, %v639
    %v1468 = vpop.permute.xlu0 %1467
    %v1470 = vmul.f32 %v1464, %v1468
    %v1471 = vmul.f32 %v1465, %v1468
    %v1472 = vmul.f32 %v1470, %v587
    %v1473 = vmul.f32 %v1471, %v588
    %v1474 = vadd.f32 %v1457, %v1472
    %v1475 = vadd.f32 %v1458, %v1473
    %1476 = vrot.lane.b32.xlu0 %v562, 81
    %v1477 = vpop.permute.xlu0 %1476
    %1478 = vrot.lane.b32.xlu0 %v563, 81
    %v1479 = vpop.permute.xlu0 %1478
    %vm1480 = vcmp.lt.s32.totalorder %v41, 81
    %v1481 = vsel %vm1480, %v1477, %v1479
    %v1482 = vsel %vm1480, %v1479, %v1477
    %1483 = vset.pattern.permute.xlu0 44
    %1484 = vperm.xlu0 %1483, %v639
    %v1485 = vpop.permute.xlu0 %1484
    %v1487 = vmul.f32 %v1481, %v1485
    %v1488 = vmul.f32 %v1482, %v1485
    %v1489 = vmul.f32 %v1487, %v597
    %v1490 = vmul.f32 %v1488, %v598
    %v1491 = vadd.f32 %v1474, %v1489
    %v1492 = vadd.f32 %v1475, %v1490
    %1493 = vrot.lane.b32.xlu0 %v562, 80
    %v1494 = vpop.permute.xlu0 %1493
    %1495 = vrot.lane.b32.xlu0 %v563, 80
    %v1496 = vpop.permute.xlu0 %1495
    %vm1497 = vcmp.lt.s32.totalorder %v41, 80
    %v1498 = vsel %vm1497, %v1494, %v1496
    %v1499 = vsel %vm1497, %v1496, %v1494
    %1500 = vset.pattern.permute.xlu0 45
    %1501 = vperm.xlu0 %1500, %v639
    %v1502 = vpop.permute.xlu0 %1501
    %v1504 = vmul.f32 %v1498, %v1502
    %v1505 = vmul.f32 %v1499, %v1502
    %v1506 = vmul.f32 %v1504, %v607
    %v1507 = vmul.f32 %v1505, %v608
    %v1508 = vadd.f32 %v1491, %v1506
    %v1509 = vadd.f32 %v1492, %v1507
    %1510 = vrot.lane.b32.xlu0 %v562, 79
    %v1511 = vpop.permute.xlu0 %1510
    %1512 = vrot.lane.b32.xlu0 %v563, 79
    %v1513 = vpop.permute.xlu0 %1512
    %vm1514 = vcmp.lt.s32.totalorder %v41, 79
    %v1515 = vsel %vm1514, %v1511, %v1513
    %v1516 = vsel %vm1514, %v1513, %v1511
    %1517 = vset.pattern.permute.xlu0 46
    %1518 = vperm.xlu0 %1517, %v639
    %v1519 = vpop.permute.xlu0 %1518
    %v1521 = vmul.f32 %v1515, %v1519
    %v1522 = vmul.f32 %v1516, %v1519
    %v1523 = vmul.f32 %v1521, %v617
    %v1524 = vmul.f32 %v1522, %v618
    %v1525 = vadd.f32 %v1508, %v1523
    %v1526 = vadd.f32 %v1509, %v1524
    %1527 = vrot.lane.b32.xlu0 %v562, 78
    %v1528 = vpop.permute.xlu0 %1527
    %1529 = vrot.lane.b32.xlu0 %v563, 78
    %v1530 = vpop.permute.xlu0 %1529
    %vm1531 = vcmp.lt.s32.totalorder %v41, 78
    %v1532 = vsel %vm1531, %v1528, %v1530
    %v1533 = vsel %vm1531, %v1530, %v1528
    %1534 = vset.pattern.permute.xlu0 47
    %1535 = vperm.xlu0 %1534, %v639
    %v1536 = vpop.permute.xlu0 %1535
    %v1538 = vmul.f32 %v1532, %v1536
    %v1539 = vmul.f32 %v1533, %v1536
    %v1540 = vmul.f32 %v1538, %v627
    %v1541 = vmul.f32 %v1539, %v628
    %v1542 = vadd.f32 %v1525, %v1540
    %v1543 = vadd.f32 %v1526, %v1541
    %1544 = vrot.lane.b32.xlu0 %v562, 77
    %v1545 = vpop.permute.xlu0 %1544
    %1546 = vrot.lane.b32.xlu0 %v563, 77
    %v1547 = vpop.permute.xlu0 %1546
    %vm1548 = vcmp.lt.s32.totalorder %v41, 77
    %v1549 = vsel %vm1548, %v1545, %v1547
    %v1550 = vsel %vm1548, %v1547, %v1545
    %1551 = vset.pattern.permute.xlu0 48
    %1552 = vperm.xlu0 %1551, %v639
    %v1553 = vpop.permute.xlu0 %1552
    %v1555 = vmul.f32 %v1549, %v1553
    %v1556 = vmul.f32 %v1550, %v1553
    %v1557 = vmul.f32 %v1555, %v637
    %v1558 = vmul.f32 %v1556, %v638
    %v1559 = vadd.f32 %v1542, %v1557
    %v1560 = vadd.f32 %v1543, %v1558
    %v1561 = vmul.f32 %v1559, %v1440
    %v1562 = vmul.f32 %v1560, %v1441
    %v1563 = vadd.f32 %v1430, %v1561
    %v1564 = vadd.f32 %v1431, %v1562
    %v1567 = vrot.slane %v1563, 1
    %v1568 = vrot.slane %v1564, 1
    %v1571 = vadd.f32 %v1563, %v1567
    %v1572 = vadd.f32 %v1564, %v1568
    %v1573 = vmul.f32 %v1571, 0.999995
    %v1574 = vmul.f32 %v1572, 0.999995
    %v1575 = vxor.u32 %v1573, 2147483648
    %v1576 = vxor.u32 %v1574, 2147483648
    %v1577 = vmul.f32 %v1575, 1.442695
    %v1578 = vpow.pop %v1577
    %v1579 = vmul.f32 %v1576, 1.442695
    %v1580 = vpow.pop %v1579
    %v1581 = vadd.f32 %v1578, 1.0
    %v1582 = vadd.f32 %v1580, 1.0
    %v1583 = vrcp.pop %v1581
    %v1584 = vmul.f32 %v1581, %v1583
    %v1585 = vsub.f32 1.0, %v1584
    %v1586 = vmul.f32 %v1583, %v1585
    %v1587 = vadd.f32 %v1583, %v1586
    %vm1588 = vweird.f32 %v1581
    %vm1589 = vweird.f32 %v1583
    %vm1590 = vmor %vm1588, %vm1589
    %v1591 = vsel %vm1590, %v1583, %v1587
    %v1592 = vand.u32 2147483647, %v1581
    %vm1593 = vcmp.eq.f32.partialorder %v1592, 8.507059e+37
    %v1594 = vand.u32 %v1581, 2147483648
    %v1595 = vor.u32 1.1754944e-38, %v1594
    %v1596 = vsel %vm1593, %v1595, %v1591
    %v1597 = vmul.f32 1.0, %v1596
    %v1598 = vrcp.pop %v1582
    %v1599 = vmul.f32 %v1582, %v1598
    %v1600 = vsub.f32 1.0, %v1599
    %v1601 = vmul.f32 %v1598, %v1600
    %v1602 = vadd.f32 %v1598, %v1601
    %vm1603 = vweird.f32 %v1582
    %vm1604 = vweird.f32 %v1598
    %vm1605 = vmor %vm1603, %vm1604
    %v1606 = vsel %vm1605, %v1598, %v1602
    %v1607 = vand.u32 2147483647, %v1582
    %vm1608 = vcmp.eq.f32.partialorder %v1607, 8.507059e+37
    %v1609 = vand.u32 %v1582, 2147483648
    %v1610 = vor.u32 1.1754944e-38, %v1609
    %v1611 = vsel %vm1608, %v1610, %v1606
    %v1612 = vmul.f32 1.0, %v1611
    %v1613 = vld [vmem:[#allocation5] sm:$0xff]
    %v1614 = vld [vmem:[#allocation5 + $0x8] sm:$0xff]
    %v1615 = vld [vmem:[#allocation5 + $0x10] sm:$0xff]
    %v1616 = vld [vmem:[#allocation5 + $0x18] sm:$0xff]
    %v1617 = vld [vmem:[#allocation5 + $0x20] sm:$0xff]
    %v1618 = vld [vmem:[#allocation5 + $0x28] sm:$0xff]
    %v1619 = vld [vmem:[#allocation5 + $0x30] sm:$0xff]
    %v1620 = vld [vmem:[#allocation5 + $0x38] sm:$0xff]
    %v1621 = vperm.slane %v1597, 0
    %v1622 = vperm.slane %v1612, 0
    %v1623 = vmul.f32 %v1613, %v1621
    %v1624 = vmul.f32 %v1614, %v1622
    %v1625 = vmul.f32 %v1615, %v1621
    %v1626 = vmul.f32 %v1616, %v1622
    %v1627 = vmul.f32 %v1617, %v1621
    %v1628 = vmul.f32 %v1618, %v1622
    %v1629 = vmul.f32 %v1619, %v1621
    %v1630 = vmul.f32 %v1620, %v1622
    %1631 = vst [vmem:[#allocation5] sm:$0xff] %v1623
    %1632 = vst [vmem:[#allocation5 + $0x8] sm:$0xff] %v1624
    %1633 = vst [vmem:[#allocation5 + $0x10] sm:$0xff] %v1625
    %1634 = vst [vmem:[#allocation5 + $0x18] sm:$0xff] %v1626
    %1635 = vst [vmem:[#allocation5 + $0x20] sm:$0xff] %v1627
    %1636 = vst [vmem:[#allocation5 + $0x28] sm:$0xff] %v1628
    %1637 = vst [vmem:[#allocation5 + $0x30] sm:$0xff] %v1629
    %1638 = vst [vmem:[#allocation5 + $0x38] sm:$0xff] %v1630
    %v1639 = vld [vmem:[%s511] sm:$0xff]
    %v1640 = vld [vmem:[%s511 + $0x8] sm:$0xff]
    %v1641 = vld [vmem:[%s511 + $0x10] sm:$0xff]
    %v1642 = vld [vmem:[%s511 + $0x18] sm:$0xff]
    %v1643 = vld [vmem:[%s511 + $0x20] sm:$0xff]
    %v1644 = vld [vmem:[%s511 + $0x28] sm:$0xff]
    %v1645 = vld [vmem:[%s511 + $0x30] sm:$0xff]
    %v1646 = vld [vmem:[%s511 + $0x38] sm:$0xff]
    %v1647 = vperm.slane %v1597, 2
    %v1648 = vperm.slane %v1612, 2
    %v1649 = vmul.f32 %v1639, %v1647
    %v1650 = vmul.f32 %v1640, %v1648
    %v1651 = vmul.f32 %v1641, %v1647
    %v1652 = vmul.f32 %v1642, %v1648
    %v1653 = vmul.f32 %v1643, %v1647
    %v1654 = vmul.f32 %v1644, %v1648
    %v1655 = vmul.f32 %v1645, %v1647
    %v1656 = vmul.f32 %v1646, %v1648
    %1657 = vst [vmem:[%s511] sm:$0xff] %v1649
    %1658 = vst [vmem:[%s511 + $0x8] sm:$0xff] %v1650
    %1659 = vst [vmem:[%s511 + $0x10] sm:$0xff] %v1651
    %1660 = vst [vmem:[%s511 + $0x18] sm:$0xff] %v1652
    %1661 = vst [vmem:[%s511 + $0x20] sm:$0xff] %v1653
    %1662 = vst [vmem:[%s511 + $0x28] sm:$0xff] %v1654
    %1663 = vst [vmem:[%s511 + $0x30] sm:$0xff] %v1655
    %1664 = vst [vmem:[%s511 + $0x38] sm:$0xff] %v1656
    // Predicated region
    $region30: #{tpu_custom_call.1} parent=1 // pred_check
      _
    $region31: #{tpu_custom_call.1} parent=1 // pred_check_branch
      %1666 = sbr.rel (0) target = $region33
    $region32: #{tpu_custom_call.1} parent=1 // pred_region
      %1668 = vsyncadd [#allocation4], 0
      %s1669 = sshll.u32 [#allocation5], 4
      %s1670 = int_to_ptr.vmem [resolvable:$true] %s1669
      %s1671 = sshll.u32 %s6, 4
      %s1672 = int_to_ptr.hbm [resolvable:$true] %s1671
      %1677 = dma.vmem_to_hbm [thread:$0]  %s1670, 2048, %s1672, [#allocation4], 256, 256, 16
    $region33: #{tpu_custom_call.1} parent=1 // pred_fallthru
      _
    // Predicated region
    $region34: #{tpu_custom_call.1} parent=1 // pred_check
      _
    $region35: #{tpu_custom_call.1} parent=1 // pred_check_branch
      %1679 = sbr.rel (0) target = $region37
    $region36: #{tpu_custom_call.1} parent=1 // pred_region
      %1681 = dma.done [#allocation4], 2048
    $region37: #{tpu_custom_call.1} parent=1 // pred_fallthru
      _
    %1682 = vsyncpa [#allocation3], 1
    %1683 = vsyncpa [#allocation4], 1

</llo_original>
